<compile_context>
chip_gen: v7x
topology: tpu7x:2x2x1
jax: 0.10.0
libtpu: 0.0.40
codegen_flags: <defaults>
</compile_context>

<pallas_src>
import functools
import numpy as np
import jax
import jax.numpy as jnp
from jax.experimental import pallas as pl
from jax.experimental.pallas import tpu as pltpu

BN_EPS = 1e-5


# ------------------------------ fused kernel --------------------------------

def _cnn_kernel(p1_ref, t1_ref, t2_ref, t3_ref,
                s1_ref, st1_ref, s2_ref, st2_ref, s3_ref, st3_ref,
                g1_ref, be1_ref, g2_ref, be2_ref, g3_ref, be3_ref,
                pw1_ref, pw2_ref, f1_ref, fb1_ref, f2_ref, fb2_ref,
                o_ref,
                y1_scr, a2_scr, y2_scr, a3_scr, y3_scr,
                *, batch, h, w):
    bf16 = jnp.bfloat16
    n = batch
    h2, w2 = h // 2, w // 2
    h3, w3 = h // 4, w // 4
    oh3, ow3 = (h3 - 3) // 2 + 1, (w3 - 3) // 2 + 1

    def mm(a, b):
        return jnp.dot(a, b, preferred_element_type=jnp.float32)

    def bn_relu(y, s_ref, st_ref, g_ref, beta_ref, count):
        # Channels are contiguous lane segments; S / S^T do the segmented
        # reduce / broadcast back.  Fused: ONE matmul for (sum, sumsq) and
        # ONE for (scale, shift).  All statistics math stays in f32.
        stats = jnp.concatenate(
            [jnp.sum(y, axis=0, keepdims=True),
             jnp.sum(y * y, axis=0, keepdims=True)], axis=0)            # (2, L)
        cs = mm(stats, s_ref[...])                                       # (2, C)
        inv = 1.0 / count
        mean = cs[0:1, :] * inv
        var = jnp.maximum(cs[1:2, :] * inv - mean * mean, 0.0)
        scale = g_ref[...] * jax.lax.rsqrt(var + BN_EPS)                 # (1, C)
        shift = beta_ref[...] - mean * scale
        aff = mm(jnp.concatenate([scale, shift], axis=0), st_ref[...])   # (2, L)
        return jnp.maximum(y * aff[0:1, :] + aff[1:2, :], 0.0)

    def pool_rows(src_ref, rows_out):
        # AvgPool2d row direction: strided VPU add, no matmul on the MXU.
        return (src_ref[pl.ds(0, rows_out, 2), :] +
                src_ref[pl.ds(1, rows_out, 2), :]) * 0.5

    # ---- conv1 (3x3, pad 1) + bn1 + relu ------------------------------------
    # p1_ref is the host-prepared im2col slab (n*h, 3*(w+2)), batch on rows.
    y1_scr[...] = bn_relu(mm(p1_ref[...], t1_ref[...]),
                          s1_ref, st1_ref, g1_ref, be1_ref, float(n * h * w))

    # ---- avg-pool(2) + zero pad for conv2 -----------------------------------
    yr1 = pool_rows(y1_scr, n * h2)                                 # (n*h2, 4*w)
    a2 = mm(yr1.astype(bf16), pw1_ref[...])                         # (n*h2, 4*(w2+2))
    hp2 = h2 + 2
    a2_scr[...] = jnp.zeros(a2_scr.shape, a2_scr.dtype)
    for b in range(n):                                              # static, tiny
        a2_scr[b * hp2 + 1:b * hp2 + 1 + h2, :] = a2[b * h2:(b + 1) * h2, :]

    # ---- conv2 (3x3, pad 1) + bn2 + relu ------------------------------------
    p2 = jnp.concatenate(
        [jnp.concatenate([a2_scr[b * hp2 + i:b * hp2 + i + h2, :]
                          for b in range(n)], axis=0)
         for i in range(3)], axis=1)                                # (n*h2, 3*4*(w2+2))
    y2_scr[...] = bn_relu(mm(p2.astype(bf16), t2_ref[...]),
                          s2_ref, st2_ref, g2_ref, be2_ref, float(n * h2 * w2))

    # ---- avg-pool(2) (conv3 is unpadded, so no re-pad) -----------------------
    yr2 = pool_rows(y2_scr, n * h3)                                 # (n*h3, 8*w2)
    a3_scr[...] = mm(yr2.astype(bf16), pw2_ref[...])                # (n*h3, 8*w3)

    # ---- conv3 (3x3, stride 2, no pad) + bn3 + relu ---------------------------
    p3 = jnp.concatenate(
        [jnp.concatenate([a3_scr[pl.ds(b * h3 + i, oh3, 2), :]
                          for b in range(n)], axis=0)
         for i in range(3)], axis=1)                                # (n*oh3, 3*8*w3)
    y3_scr[...] = bn_relu(mm(p3.astype(bf16), t3_ref[...]),
                          s3_ref, st3_ref, g3_ref, be3_ref, float(n * oh3 * ow3))

    # ---- flatten (NCHW order folded into f1) + fc1 + relu + fc2 ---------------
    pfc = jnp.concatenate([y3_scr[pl.ds(t, n, oh3), :] for t in range(oh3)],
                          axis=1)                                   # (n, 16*oh3*ow3)
    hid = jnp.maximum(mm(pfc.astype(bf16), f1_ref[...]) + fb1_ref[...], 0.0)
    o_ref[...] = mm(hid.astype(bf16), f2_ref[...]) + fb2_ref[...]


# ----------------------------- pallas_call glue ------------------------------

_PARAM_ORDER = ("t1", "t2", "t3", "s1", "st1", "s2", "st2", "s3", "st3",
                "g1", "be1", "g2", "be2", "g3", "be3",
                "pw1", "pw2", "f1", "fb1", "f2", "fb2")
_BF16_PARAMS = frozenset({"t1", "t2", "t3", "pw1", "pw2", "f1", "f2"})


def cnn_forward(params, x_nchw):
    b, _, h, w = x_nchw.shape
    h2, w2, h3, w3 = h // 2, w // 2, h // 4, w // 4
    oh3, ow3 = (h3 - 3) // 2 + 1, (w3 - 3) // 2 + 1

    # Host-side prep (tiny one-shot XLA ops, ~20 KB): zero-pad and build the
    # conv1 three-row im2col slab with the batch stacked on the sublane axis.
    x = x_nchw.reshape(b, h, w).astype(jnp.float32)    # free reshape (Cin == 1)
    xp = jnp.pad(x, ((0, 0), (1, 1), (1, 1)))
    p1 = jnp.concatenate([xp[:, 0:h, :], xp[:, 1:h + 1, :], xp[:, 2:h + 2, :]],
                         axis=-1).reshape(b * h, 3 * (w + 2)).astype(jnp.bfloat16)

    args = [p1] + [params[k] for k in _PARAM_ORDER]
    vmem = pl.BlockSpec(memory_space=pltpu.MemorySpace.VMEM)
    return pl.pallas_call(
        functools.partial(_cnn_kernel, batch=b, h=h, w=w),
        out_shape=jax.ShapeDtypeStruct((b, 10), jnp.float32),
        in_specs=[vmem] * len(args),
        out_specs=vmem,
        scratch_shapes=[
            pltpu.VMEM((b * h, 4 * w), jnp.float32),                 # bn1+relu out
            pltpu.VMEM((b * (h2 + 2), 4 * (w2 + 2)), jnp.float32),   # padded conv2 in
            pltpu.VMEM((b * h2, 8 * w2), jnp.float32),               # bn2+relu out
            pltpu.VMEM((b * h3, 8 * w3), jnp.float32),               # conv3 in
            pltpu.VMEM((b * oh3, 16 * ow3), jnp.float32),            # bn3+relu out
        ],
    )(*args)


# ----------------------- structural constants (init time) --------------------

def _build_toeplitz(wt, w_pad, ow, stride):
    """Conv weight (Cout, Cin, 3, 3) -> batch-independent block-banded matmul.

    rows: (i*Cin + cin)*w_pad + wp   (lane layout of the 3-row im2col slab)
    cols: cout*ow + o                (lane layout of the conv output)
    """
    cout, cin, kh, kw = wt.shape
    t = np.zeros((kh * cin * w_pad, cout * ow), np.float32)
    cols = np.arange(cout) * ow
    for i in range(kh):
        for ci in range(cin):
            for wp in range(w_pad):
                row = (i * cin + ci) * w_pad + wp
                for o in range(ow):
                    j = wp - stride * o
                    if 0 <= j < kw:
                        t[row, cols + o] = wt[:, ci, i, j]
    return t


def _build_pool_w(chans, w_in, w_out, pad):
    """AvgPool2d(2) column direction + zero padding of the next conv's input."""
    wp_out = w_out + 2 * pad
    p = np.zeros((chans * w_in, chans * wp_out), np.float32)
    for c in range(chans):
        for ow in range(w_in):
            p[c * w_in + ow, c * wp_out + ow // 2 + pad] = 0.5
    return p


def _build_chan_seg(chans, width):
    s = np.zeros((chans * width, chans), np.float32)
    for c in range(chans):
        s[c * width:(c + 1) * width, c] = 1.0
    return s


def init_params(key, image_w, image_h):
    """Synthetic parameters (PyTorch-style uniform init), pre-baked at init
    into the batch-independent constant matrices the fused kernel consumes."""
    def uni(k, shape, fan_in):
        bound = 1.0 / float(fan_in) ** 0.5
        return np.asarray(jax.random.uniform(k, shape, jnp.float32, -bound, bound))

    h, w = image_h, image_w
    h2, w2, h3, w3 = h // 2, w // 2, h // 4, w // 4
    oh3, ow3 = (h3 - 3) // 2 + 1, (w3 - 3) // 2 + 1
    fc1_in = 16 * (w // 8) * (h // 8)
    assert fc1_in == 16 * oh3 * ow3, "image size inconsistent with fc1 sizing"

    keys = jax.random.split(key, 7)
    w1c = uni(keys[0], (4, 1, 3, 3), 9)
    w2c = uni(keys[1], (8, 4, 3, 3), 36)
    w3c = uni(keys[2], (16, 8, 3, 3), 72)
    fc1_w = uni(keys[3], (72, fc1_in), fc1_in)
    fc1_b = uni(keys[4], (1, 72), fc1_in)
    fc2_w = uni(keys[5], (10, 72), 72)
    fc2_b = uni(keys[6], (1, 10), 72)
    # Conv biases are intentionally omitted: a per-channel constant added
    # before training-mode BatchNorm is exactly cancelled by the mean
    # subtraction, so they are dead work in this forward pass.

    p = {}
    # conv weights in block-banded ("Toeplitz") matmul form, batch on sublanes
    p["t1"] = _build_toeplitz(w1c, w + 2, w, 1)
    p["t2"] = _build_toeplitz(w2c, w2 + 2, w2, 1)
    p["t3"] = _build_toeplitz(w3c, w3, ow3, 2)
    # per-channel segment matrices for the BatchNorm reductions + affine params
    for name, c, width in (("1", 4, w), ("2", 8, w2), ("3", 16, ow3)):
        s = _build_chan_seg(c, width)
        p["s" + name] = s
        p["st" + name] = np.ascontiguousarray(s.T)
        p["g" + name] = np.ones((1, c), np.float32)      # BN gamma
        p["be" + name] = np.zeros((1, c), np.float32)    # BN beta
    # fused AvgPool2d(2) column direction + zero padding of the next conv input
    p["pw1"] = _build_pool_w(4, w, w2, 1)
    p["pw2"] = _build_pool_w(8, w2, w3, 0)
    # fc1: fold PyTorch's NCHW flatten (feature = (c*oh3 + oh)*ow3 + ow) into a
    # row permutation; the kernel builds features in (oh, c, ow) order.
    f1 = np.zeros((fc1_in, 72), np.float32)
    for oh in range(oh3):
        for c in range(16):
            for ow in range(ow3):
                f1[(oh * 16 + c) * ow3 + ow, :] = fc1_w[:, (c * oh3 + oh) * ow3 + ow]
    p["f1"] = f1
    p["fb1"] = fc1_b
    p["f2"] = np.ascontiguousarray(fc2_w.T)              # (72, 10)
    p["fb2"] = fc2_b
    return {k: jnp.asarray(v, dtype=(jnp.bfloat16 if k in _BF16_PARAMS
                                     else jnp.float32))
            for k, v in p.items()}


# ----------------------------------- main ------------------------------------

if __name__ == "__main__":
    IMAGE_W = IMAGE_H = 28     # MNIST-like; satisfies the module's fc1 sizing
    BATCH = 2

    key = jax.random.PRNGKey(0)
    k_param, k_input = jax.random.split(key)
    params = init_params(k_param, IMAGE_W, IMAGE_H)
    x = jax.random.normal(k_input, (BATCH, 1, IMAGE_H, IMAGE_W), jnp.float32)

    out = jax.jit(cnn_forward)(params, x)
    out = jax.block_until_ready(out)

    assert out.shape == (BATCH, 10), out.shape
    assert bool(jnp.all(jnp.isfinite(out)))
    print("KERNEL_OK")
</pallas_src>

<mosaic_0001>
module attributes {stable_mosaic.version = 11 : i64} {
  func.func @_cnn_kernel(%arg0: memref<56x90xbf16, #tpu.memory_space<vmem>>, %arg1: memref<90x112xbf16, #tpu.memory_space<vmem>>, %arg2: memref<192x112xbf16, #tpu.memory_space<vmem>>, %arg3: memref<168x48xbf16, #tpu.memory_space<vmem>>, %arg4: memref<112x4xf32, #tpu.memory_space<vmem>>, %arg5: memref<4x112xf32, #tpu.memory_space<vmem>>, %arg6: memref<112x8xf32, #tpu.memory_space<vmem>>, %arg7: memref<8x112xf32, #tpu.memory_space<vmem>>, %arg8: memref<48x16xf32, #tpu.memory_space<vmem>>, %arg9: memref<16x48xf32, #tpu.memory_space<vmem>>, %arg10: memref<1x4xf32, #tpu.memory_space<vmem>>, %arg11: memref<1x4xf32, #tpu.memory_space<vmem>>, %arg12: memref<1x8xf32, #tpu.memory_space<vmem>>, %arg13: memref<1x8xf32, #tpu.memory_space<vmem>>, %arg14: memref<1x16xf32, #tpu.memory_space<vmem>>, %arg15: memref<1x16xf32, #tpu.memory_space<vmem>>, %arg16: memref<112x64xbf16, #tpu.memory_space<vmem>>, %arg17: memref<112x56xbf16, #tpu.memory_space<vmem>>, %arg18: memref<144x72xbf16, #tpu.memory_space<vmem>>, %arg19: memref<1x72xf32, #tpu.memory_space<vmem>>, %arg20: memref<72x10xbf16, #tpu.memory_space<vmem>>, %arg21: memref<1x10xf32, #tpu.memory_space<vmem>>, %arg22: memref<2x10xf32, #tpu.memory_space<vmem>>, %arg23: memref<56x112xf32, #tpu.memory_space<vmem>>, %arg24: memref<32x64xf32, #tpu.memory_space<vmem>>, %arg25: memref<28x112xf32, #tpu.memory_space<vmem>>, %arg26: memref<14x56xf32, #tpu.memory_space<vmem>>, %arg27: memref<6x48xf32, #tpu.memory_space<vmem>>) attributes {dimension_semantics = [], scalar_prefetch = 0 : i64, scratch_operands = 5 : i64, tpu.core_type = #tpu.core_type<tc>} {
    %c0 = arith.constant 0 : index
    %c0_0 = arith.constant 0 : index
    %0 = vector.load %arg0[%c0, %c0_0] : memref<56x90xbf16, #tpu.memory_space<vmem>>, vector<56x90xbf16>
    %c0_1 = arith.constant 0 : index
    %c0_2 = arith.constant 0 : index
    %1 = vector.load %arg1[%c0_1, %c0_2] : memref<90x112xbf16, #tpu.memory_space<vmem>>, vector<90x112xbf16>
    %cst = arith.constant dense<0.000000e+00> : vector<56x112xf32>
    %2 = tpu.matmul %0, %1, %cst {dimension_numbers = #tpu.dot_dimension_numbers<[1], [0], [0], [1], [0, 0, 1, 1], [], []>} : vector<56x90xbf16>, vector<90x112xbf16>, vector<56x112xf32> -> vector<56x112xf32>
    %cst_3 = arith.constant dense<0.000000e+00> : vector<112xf32>
    %3 = vector.multi_reduction <add>, %2, %cst_3 [0] : vector<56x112xf32> to vector<112xf32>
    %4 = vector.shape_cast %3 : vector<112xf32> to vector<1x112xf32>
    %5 = arith.mulf %2, %2 : vector<56x112xf32>
    %cst_4 = arith.constant dense<0.000000e+00> : vector<112xf32>
    %6 = vector.multi_reduction <add>, %5, %cst_4 [0] : vector<56x112xf32> to vector<112xf32>
    %7 = vector.shape_cast %6 : vector<112xf32> to vector<1x112xf32>
    %8 = tpu.concatenate %4, %7 in 0 : vector<1x112xf32>, vector<1x112xf32> -> vector<2x112xf32>
    %c0_5 = arith.constant 0 : index
    %c0_6 = arith.constant 0 : index
    %9 = vector.load %arg4[%c0_5, %c0_6] : memref<112x4xf32, #tpu.memory_space<vmem>>, vector<112x4xf32>
    %cst_7 = arith.constant dense<0.000000e+00> : vector<2x4xf32>
    %10 = tpu.matmul %8, %9, %cst_7 {dimension_numbers = #tpu.dot_dimension_numbers<[1], [0], [0], [1], [0, 0, 1, 1], [], []>} : vector<2x112xf32>, vector<112x4xf32>, vector<2x4xf32> -> vector<2x4xf32>
    %11 = vector.extract_strided_slice %10 {offsets = [0, 0], sizes = [1, 4], strides = [1, 1]} : vector<2x4xf32> to vector<1x4xf32>
    %cst_8 = arith.constant 6.37755089E-4 : f32
    %12 = vector.broadcast %cst_8 : f32 to vector<1x4xf32>
    %13 = arith.mulf %11, %12 : vector<1x4xf32>
    %14 = vector.extract_strided_slice %10 {offsets = [1, 0], sizes = [1, 4], strides = [1, 1]} : vector<2x4xf32> to vector<1x4xf32>
    %cst_9 = arith.constant 6.37755089E-4 : f32
    %15 = vector.broadcast %cst_9 : f32 to vector<1x4xf32>
    %16 = arith.mulf %14, %15 : vector<1x4xf32>
    %17 = arith.mulf %13, %13 : vector<1x4xf32>
    %18 = arith.subf %16, %17 : vector<1x4xf32>
    %cst_10 = arith.constant 0.000000e+00 : f32
    %19 = vector.broadcast %cst_10 : f32 to vector<1x4xf32>
    %20 = arith.maximumf %18, %19 : vector<1x4xf32>
    %c0_11 = arith.constant 0 : index
    %c0_12 = arith.constant 0 : index
    %21 = vector.load %arg10[%c0_11, %c0_12] : memref<1x4xf32, #tpu.memory_space<vmem>>, vector<1x4xf32>
    %cst_13 = arith.constant 9.99999974E-6 : f32
    %22 = vector.broadcast %cst_13 : f32 to vector<1x4xf32>
    %23 = arith.addf %20, %22 : vector<1x4xf32>
    %24 = math.rsqrt %23 : vector<1x4xf32>
    %25 = arith.mulf %21, %24 : vector<1x4xf32>
    %c0_14 = arith.constant 0 : index
    %c0_15 = arith.constant 0 : index
    %26 = vector.load %arg11[%c0_14, %c0_15] : memref<1x4xf32, #tpu.memory_space<vmem>>, vector<1x4xf32>
    %27 = arith.mulf %13, %25 : vector<1x4xf32>
    %28 = arith.subf %26, %27 : vector<1x4xf32>
    %29 = tpu.concatenate %25, %28 in 0 : vector<1x4xf32>, vector<1x4xf32> -> vector<2x4xf32>
    %c0_16 = arith.constant 0 : index
    %c0_17 = arith.constant 0 : index
    %30 = vector.load %arg5[%c0_16, %c0_17] : memref<4x112xf32, #tpu.memory_space<vmem>>, vector<4x112xf32>
    %cst_18 = arith.constant dense<0.000000e+00> : vector<2x112xf32>
    %31 = tpu.matmul %29, %30, %cst_18 {dimension_numbers = #tpu.dot_dimension_numbers<[1], [0], [0], [1], [0, 0, 1, 1], [], []>} : vector<2x4xf32>, vector<4x112xf32>, vector<2x112xf32> -> vector<2x112xf32>
    %32 = vector.extract_strided_slice %31 {offsets = [0, 0], sizes = [1, 112], strides = [1, 1]} : vector<2x112xf32> to vector<1x112xf32>
    %33 = vector.broadcast %32 : vector<1x112xf32> to vector<56x112xf32>
    %34 = arith.mulf %2, %33 : vector<56x112xf32>
    %35 = vector.extract_strided_slice %31 {offsets = [1, 0], sizes = [1, 112], strides = [1, 1]} : vector<2x112xf32> to vector<1x112xf32>
    %36 = vector.broadcast %35 : vector<1x112xf32> to vector<56x112xf32>
    %37 = arith.addf %34, %36 : vector<56x112xf32>
    %cst_19 = arith.constant 0.000000e+00 : f32
    %38 = vector.broadcast %cst_19 : f32 to vector<56x112xf32>
    %39 = arith.maximumf %37, %38 : vector<56x112xf32>
    %c0_20 = arith.constant 0 : index
    %c0_21 = arith.constant 0 : index
    %40 = vector.load %arg23[%c0_20, %c0_21] : memref<56x112xf32, #tpu.memory_space<vmem>>, vector<56x112xf32>
    tpu.vector_store %arg23[%c0_20, %c0_21], %39 {strides = array<i32>} : memref<56x112xf32, #tpu.memory_space<vmem>>, vector<56x112xf32>,
    %c0_22 = arith.constant 0 : index
    %c0_23 = arith.constant 0 : index
    %41 = tpu.strided_load %arg23[%c0_22, %c0_23] {strides = array<i32: 2, 1>} : memref<56x112xf32, #tpu.memory_space<vmem>>, vector<28x112xf32>
    %c1 = arith.constant 1 : index
    %c0_24 = arith.constant 0 : index
    %42 = tpu.strided_load %arg23[%c1, %c0_24] {strides = array<i32: 2, 1>} : memref<56x112xf32, #tpu.memory_space<vmem>>, vector<28x112xf32>
    %43 = arith.addf %41, %42 : vector<28x112xf32>
    %cst_25 = arith.constant 5.000000e-01 : f32
    %44 = vector.broadcast %cst_25 : f32 to vector<28x112xf32>
    %45 = arith.mulf %43, %44 : vector<28x112xf32>
    %46 = arith.truncf %45 : vector<28x112xf32> to vector<28x112xbf16>
    %c0_26 = arith.constant 0 : index
    %c0_27 = arith.constant 0 : index
    %47 = vector.load %arg16[%c0_26, %c0_27] : memref<112x64xbf16, #tpu.memory_space<vmem>>, vector<112x64xbf16>
    %cst_28 = arith.constant dense<0.000000e+00> : vector<28x64xf32>
    %48 = tpu.matmul %46, %47, %cst_28 {dimension_numbers = #tpu.dot_dimension_numbers<[1], [0], [0], [1], [0, 0, 1, 1], [], []>} : vector<28x112xbf16>, vector<112x64xbf16>, vector<28x64xf32> -> vector<28x64xf32>
    %cst_29 = arith.constant 0.000000e+00 : f32
    %49 = vector.broadcast %cst_29 : f32 to vector<32x64xf32>
    %c0_30 = arith.constant 0 : index
    %c0_31 = arith.constant 0 : index
    %50 = vector.load %arg24[%c0_30, %c0_31] : memref<32x64xf32, #tpu.memory_space<vmem>>, vector<32x64xf32>
    tpu.vector_store %arg24[%c0_30, %c0_31], %49 {strides = array<i32>} : memref<32x64xf32, #tpu.memory_space<vmem>>, vector<32x64xf32>,
    %51 = vector.extract_strided_slice %48 {offsets = [0, 0], sizes = [14, 64], strides = [1, 1]} : vector<28x64xf32> to vector<14x64xf32>
    %c1_32 = arith.constant 1 : index
    %c0_33 = arith.constant 0 : index
    %52 = vector.load %arg24[%c1_32, %c0_33] : memref<32x64xf32, #tpu.memory_space<vmem>>, vector<14x64xf32>
    tpu.vector_store %arg24[%c1_32, %c0_33], %51 {strides = array<i32>} : memref<32x64xf32, #tpu.memory_space<vmem>>, vector<14x64xf32>,
    %53 = vector.extract_strided_slice %48 {offsets = [14, 0], sizes = [14, 64], strides = [1, 1]} : vector<28x64xf32> to vector<14x64xf32>
    %c17 = arith.constant 17 : index
    %c0_34 = arith.constant 0 : index
    %54 = vector.load %arg24[%c17, %c0_34] : memref<32x64xf32, #tpu.memory_space<vmem>>, vector<14x64xf32>
    tpu.vector_store %arg24[%c17, %c0_34], %53 {strides = array<i32>} : memref<32x64xf32, #tpu.memory_space<vmem>>, vector<14x64xf32>,
    %c0_35 = arith.constant 0 : index
    %c0_36 = arith.constant 0 : index
    %55 = vector.load %arg24[%c0_35, %c0_36] : memref<32x64xf32, #tpu.memory_space<vmem>>, vector<14x64xf32>
    %c16 = arith.constant 16 : index
    %c0_37 = arith.constant 0 : index
    %56 = vector.load %arg24[%c16, %c0_37] : memref<32x64xf32, #tpu.memory_space<vmem>>, vector<14x64xf32>
    %57 = tpu.concatenate %55, %56 in 0 : vector<14x64xf32>, vector<14x64xf32> -> vector<28x64xf32>
    %c1_38 = arith.constant 1 : index
    %c0_39 = arith.constant 0 : index
    %58 = vector.load %arg24[%c1_38, %c0_39] : memref<32x64xf32, #tpu.memory_space<vmem>>, vector<14x64xf32>
    %c17_40 = arith.constant 17 : index
    %c0_41 = arith.constant 0 : index
    %59 = vector.load %arg24[%c17_40, %c0_41] : memref<32x64xf32, #tpu.memory_space<vmem>>, vector<14x64xf32>
    %60 = tpu.concatenate %58, %59 in 0 : vector<14x64xf32>, vector<14x64xf32> -> vector<28x64xf32>
    %c2 = arith.constant 2 : index
    %c0_42 = arith.constant 0 : index
    %61 = vector.load %arg24[%c2, %c0_42] : memref<32x64xf32, #tpu.memory_space<vmem>>, vector<14x64xf32>
    %c18 = arith.constant 18 : index
    %c0_43 = arith.constant 0 : index
    %62 = vector.load %arg24[%c18, %c0_43] : memref<32x64xf32, #tpu.memory_space<vmem>>, vector<14x64xf32>
    %63 = tpu.concatenate %61, %62 in 0 : vector<14x64xf32>, vector<14x64xf32> -> vector<28x64xf32>
    %64 = tpu.concatenate %57, %60, %63 in 1 : vector<28x64xf32>, vector<28x64xf32>, vector<28x64xf32> -> vector<28x192xf32>
    %65 = arith.truncf %64 : vector<28x192xf32> to vector<28x192xbf16>
    %c0_44 = arith.constant 0 : index
    %c0_45 = arith.constant 0 : index
    %66 = vector.load %arg2[%c0_44, %c0_45] : memref<192x112xbf16, #tpu.memory_space<vmem>>, vector<192x112xbf16>
    %cst_46 = arith.constant dense<0.000000e+00> : vector<28x112xf32>
    %67 = tpu.matmul %65, %66, %cst_46 {dimension_numbers = #tpu.dot_dimension_numbers<[1], [0], [0], [1], [0, 0, 1, 1], [], []>} : vector<28x192xbf16>, vector<192x112xbf16>, vector<28x112xf32> -> vector<28x112xf32>
    %cst_47 = arith.constant dense<0.000000e+00> : vector<112xf32>
    %68 = vector.multi_reduction <add>, %67, %cst_47 [0] : vector<28x112xf32> to vector<112xf32>
    %69 = vector.shape_cast %68 : vector<112xf32> to vector<1x112xf32>
    %70 = arith.mulf %67, %67 : vector<28x112xf32>
    %cst_48 = arith.constant dense<0.000000e+00> : vector<112xf32>
    %71 = vector.multi_reduction <add>, %70, %cst_48 [0] : vector<28x112xf32> to vector<112xf32>
    %72 = vector.shape_cast %71 : vector<112xf32> to vector<1x112xf32>
    %73 = tpu.concatenate %69, %72 in 0 : vector<1x112xf32>, vector<1x112xf32> -> vector<2x112xf32>
    %c0_49 = arith.constant 0 : index
    %c0_50 = arith.constant 0 : index
    %74 = vector.load %arg6[%c0_49, %c0_50] : memref<112x8xf32, #tpu.memory_space<vmem>>, vector<112x8xf32>
    %cst_51 = arith.constant dense<0.000000e+00> : vector<2x8xf32>
    %75 = tpu.matmul %73, %74, %cst_51 {dimension_numbers = #tpu.dot_dimension_numbers<[1], [0], [0], [1], [0, 0, 1, 1], [], []>} : vector<2x112xf32>, vector<112x8xf32>, vector<2x8xf32> -> vector<2x8xf32>
    %76 = vector.extract_strided_slice %75 {offsets = [0, 0], sizes = [1, 8], strides = [1, 1]} : vector<2x8xf32> to vector<1x8xf32>
    %cst_52 = arith.constant 0.00255102036 : f32
    %77 = vector.broadcast %cst_52 : f32 to vector<1x8xf32>
    %78 = arith.mulf %76, %77 : vector<1x8xf32>
    %79 = vector.extract_strided_slice %75 {offsets = [1, 0], sizes = [1, 8], strides = [1, 1]} : vector<2x8xf32> to vector<1x8xf32>
    %cst_53 = arith.constant 0.00255102036 : f32
    %80 = vector.broadcast %cst_53 : f32 to vector<1x8xf32>
    %81 = arith.mulf %79, %80 : vector<1x8xf32>
    %82 = arith.mulf %78, %78 : vector<1x8xf32>
    %83 = arith.subf %81, %82 : vector<1x8xf32>
    %cst_54 = arith.constant 0.000000e+00 : f32
    %84 = vector.broadcast %cst_54 : f32 to vector<1x8xf32>
    %85 = arith.maximumf %83, %84 : vector<1x8xf32>
    %c0_55 = arith.constant 0 : index
    %c0_56 = arith.constant 0 : index
    %86 = vector.load %arg12[%c0_55, %c0_56] : memref<1x8xf32, #tpu.memory_space<vmem>>, vector<1x8xf32>
    %cst_57 = arith.constant 9.99999974E-6 : f32
    %87 = vector.broadcast %cst_57 : f32 to vector<1x8xf32>
    %88 = arith.addf %85, %87 : vector<1x8xf32>
    %89 = math.rsqrt %88 : vector<1x8xf32>
    %90 = arith.mulf %86, %89 : vector<1x8xf32>
    %c0_58 = arith.constant 0 : index
    %c0_59 = arith.constant 0 : index
    %91 = vector.load %arg13[%c0_58, %c0_59] : memref<1x8xf32, #tpu.memory_space<vmem>>, vector<1x8xf32>
    %92 = arith.mulf %78, %90 : vector<1x8xf32>
    %93 = arith.subf %91, %92 : vector<1x8xf32>
    %94 = tpu.concatenate %90, %93 in 0 : vector<1x8xf32>, vector<1x8xf32> -> vector<2x8xf32>
    %c0_60 = arith.constant 0 : index
    %c0_61 = arith.constant 0 : index
    %95 = vector.load %arg7[%c0_60, %c0_61] : memref<8x112xf32, #tpu.memory_space<vmem>>, vector<8x112xf32>
    %cst_62 = arith.constant dense<0.000000e+00> : vector<2x112xf32>
    %96 = tpu.matmul %94, %95, %cst_62 {dimension_numbers = #tpu.dot_dimension_numbers<[1], [0], [0], [1], [0, 0, 1, 1], [], []>} : vector<2x8xf32>, vector<8x112xf32>, vector<2x112xf32> -> vector<2x112xf32>
    %97 = vector.extract_strided_slice %96 {offsets = [0, 0], sizes = [1, 112], strides = [1, 1]} : vector<2x112xf32> to vector<1x112xf32>
    %98 = vector.broadcast %97 : vector<1x112xf32> to vector<28x112xf32>
    %99 = arith.mulf %67, %98 : vector<28x112xf32>
    %100 = vector.extract_strided_slice %96 {offsets = [1, 0], sizes = [1, 112], strides = [1, 1]} : vector<2x112xf32> to vector<1x112xf32>
    %101 = vector.broadcast %100 : vector<1x112xf32> to vector<28x112xf32>
    %102 = arith.addf %99, %101 : vector<28x112xf32>
    %cst_63 = arith.constant 0.000000e+00 : f32
    %103 = vector.broadcast %cst_63 : f32 to vector<28x112xf32>
    %104 = arith.maximumf %102, %103 : vector<28x112xf32>
    %c0_64 = arith.constant 0 : index
    %c0_65 = arith.constant 0 : index
    %105 = vector.load %arg25[%c0_64, %c0_65] : memref<28x112xf32, #tpu.memory_space<vmem>>, vector<28x112xf32>
    tpu.vector_store %arg25[%c0_64, %c0_65], %104 {strides = array<i32>} : memref<28x112xf32, #tpu.memory_space<vmem>>, vector<28x112xf32>,
    %c0_66 = arith.constant 0 : index
    %c0_67 = arith.constant 0 : index
    %106 = tpu.strided_load %arg25[%c0_66, %c0_67] {strides = array<i32: 2, 1>} : memref<28x112xf32, #tpu.memory_space<vmem>>, vector<14x112xf32>
    %c1_68 = arith.constant 1 : index
    %c0_69 = arith.constant 0 : index
    %107 = tpu.strided_load %arg25[%c1_68, %c0_69] {strides = array<i32: 2, 1>} : memref<28x112xf32, #tpu.memory_space<vmem>>, vector<14x112xf32>
    %108 = arith.addf %106, %107 : vector<14x112xf32>
    %cst_70 = arith.constant 5.000000e-01 : f32
    %109 = vector.broadcast %cst_70 : f32 to vector<14x112xf32>
    %110 = arith.mulf %108, %109 : vector<14x112xf32>
    %111 = arith.truncf %110 : vector<14x112xf32> to vector<14x112xbf16>
    %c0_71 = arith.constant 0 : index
    %c0_72 = arith.constant 0 : index
    %112 = vector.load %arg17[%c0_71, %c0_72] : memref<112x56xbf16, #tpu.memory_space<vmem>>, vector<112x56xbf16>
    %cst_73 = arith.constant dense<0.000000e+00> : vector<14x56xf32>
    %113 = tpu.matmul %111, %112, %cst_73 {dimension_numbers = #tpu.dot_dimension_numbers<[1], [0], [0], [1], [0, 0, 1, 1], [], []>} : vector<14x112xbf16>, vector<112x56xbf16>, vector<14x56xf32> -> vector<14x56xf32>
    %c0_74 = arith.constant 0 : index
    %c0_75 = arith.constant 0 : index
    %114 = vector.load %arg26[%c0_74, %c0_75] : memref<14x56xf32, #tpu.memory_space<vmem>>, vector<14x56xf32>
    tpu.vector_store %arg26[%c0_74, %c0_75], %113 {strides = array<i32>} : memref<14x56xf32, #tpu.memory_space<vmem>>, vector<14x56xf32>,
    %c0_76 = arith.constant 0 : index
    %c0_77 = arith.constant 0 : index
    %115 = tpu.strided_load %arg26[%c0_76, %c0_77] {strides = array<i32: 2, 1>} : memref<14x56xf32, #tpu.memory_space<vmem>>, vector<3x56xf32>
    %c7 = arith.constant 7 : index
    %c0_78 = arith.constant 0 : index
    %116 = tpu.strided_load %arg26[%c7, %c0_78] {strides = array<i32: 2, 1>} : memref<14x56xf32, #tpu.memory_space<vmem>>, vector<3x56xf32>
    %117 = tpu.concatenate %115, %116 in 0 : vector<3x56xf32>, vector<3x56xf32> -> vector<6x56xf32>
    %c1_79 = arith.constant 1 : index
    %c0_80 = arith.constant 0 : index
    %118 = tpu.strided_load %arg26[%c1_79, %c0_80] {strides = array<i32: 2, 1>} : memref<14x56xf32, #tpu.memory_space<vmem>>, vector<3x56xf32>
    %c8 = arith.constant 8 : index
    %c0_81 = arith.constant 0 : index
    %119 = tpu.strided_load %arg26[%c8, %c0_81] {strides = array<i32: 2, 1>} : memref<14x56xf32, #tpu.memory_space<vmem>>, vector<3x56xf32>
    %120 = tpu.concatenate %118, %119 in 0 : vector<3x56xf32>, vector<3x56xf32> -> vector<6x56xf32>
    %c2_82 = arith.constant 2 : index
    %c0_83 = arith.constant 0 : index
    %121 = tpu.strided_load %arg26[%c2_82, %c0_83] {strides = array<i32: 2, 1>} : memref<14x56xf32, #tpu.memory_space<vmem>>, vector<3x56xf32>
    %c9 = arith.constant 9 : index
    %c0_84 = arith.constant 0 : index
    %122 = tpu.strided_load %arg26[%c9, %c0_84] {strides = array<i32: 2, 1>} : memref<14x56xf32, #tpu.memory_space<vmem>>, vector<3x56xf32>
    %123 = tpu.concatenate %121, %122 in 0 : vector<3x56xf32>, vector<3x56xf32> -> vector<6x56xf32>
    %124 = tpu.concatenate %117, %120, %123 in 1 : vector<6x56xf32>, vector<6x56xf32>, vector<6x56xf32> -> vector<6x168xf32>
    %125 = arith.truncf %124 : vector<6x168xf32> to vector<6x168xbf16>
    %c0_85 = arith.constant 0 : index
    %c0_86 = arith.constant 0 : index
    %126 = vector.load %arg3[%c0_85, %c0_86] : memref<168x48xbf16, #tpu.memory_space<vmem>>, vector<168x48xbf16>
    %cst_87 = arith.constant dense<0.000000e+00> : vector<6x48xf32>
    %127 = tpu.matmul %125, %126, %cst_87 {dimension_numbers = #tpu.dot_dimension_numbers<[1], [0], [0], [1], [0, 0, 1, 1], [], []>} : vector<6x168xbf16>, vector<168x48xbf16>, vector<6x48xf32> -> vector<6x48xf32>
    %cst_88 = arith.constant dense<0.000000e+00> : vector<48xf32>
    %128 = vector.multi_reduction <add>, %127, %cst_88 [0] : vector<6x48xf32> to vector<48xf32>
    %129 = vector.shape_cast %128 : vector<48xf32> to vector<1x48xf32>
    %130 = arith.mulf %127, %127 : vector<6x48xf32>
    %cst_89 = arith.constant dense<0.000000e+00> : vector<48xf32>
    %131 = vector.multi_reduction <add>, %130, %cst_89 [0] : vector<6x48xf32> to vector<48xf32>
    %132 = vector.shape_cast %131 : vector<48xf32> to vector<1x48xf32>
    %133 = tpu.concatenate %129, %132 in 0 : vector<1x48xf32>, vector<1x48xf32> -> vector<2x48xf32>
    %c0_90 = arith.constant 0 : index
    %c0_91 = arith.constant 0 : index
    %134 = vector.load %arg8[%c0_90, %c0_91] : memref<48x16xf32, #tpu.memory_space<vmem>>, vector<48x16xf32>
    %cst_92 = arith.constant dense<0.000000e+00> : vector<2x16xf32>
    %135 = tpu.matmul %133, %134, %cst_92 {dimension_numbers = #tpu.dot_dimension_numbers<[1], [0], [0], [1], [0, 0, 1, 1], [], []>} : vector<2x48xf32>, vector<48x16xf32>, vector<2x16xf32> -> vector<2x16xf32>
    %136 = vector.extract_strided_slice %135 {offsets = [0, 0], sizes = [1, 16], strides = [1, 1]} : vector<2x16xf32> to vector<1x16xf32>
    %cst_93 = arith.constant 0.055555556 : f32
    %137 = vector.broadcast %cst_93 : f32 to vector<1x16xf32>
    %138 = arith.mulf %136, %137 : vector<1x16xf32>
    %139 = vector.extract_strided_slice %135 {offsets = [1, 0], sizes = [1, 16], strides = [1, 1]} : vector<2x16xf32> to vector<1x16xf32>
    %cst_94 = arith.constant 0.055555556 : f32
    %140 = vector.broadcast %cst_94 : f32 to vector<1x16xf32>
    %141 = arith.mulf %139, %140 : vector<1x16xf32>
    %142 = arith.mulf %138, %138 : vector<1x16xf32>
    %143 = arith.subf %141, %142 : vector<1x16xf32>
    %cst_95 = arith.constant 0.000000e+00 : f32
    %144 = vector.broadcast %cst_95 : f32 to vector<1x16xf32>
    %145 = arith.maximumf %143, %144 : vector<1x16xf32>
    %c0_96 = arith.constant 0 : index
    %c0_97 = arith.constant 0 : index
    %146 = vector.load %arg14[%c0_96, %c0_97] : memref<1x16xf32, #tpu.memory_space<vmem>>, vector<1x16xf32>
    %cst_98 = arith.constant 9.99999974E-6 : f32
    %147 = vector.broadcast %cst_98 : f32 to vector<1x16xf32>
    %148 = arith.addf %145, %147 : vector<1x16xf32>
    %149 = math.rsqrt %148 : vector<1x16xf32>
    %150 = arith.mulf %146, %149 : vector<1x16xf32>
    %c0_99 = arith.constant 0 : index
    %c0_100 = arith.constant 0 : index
    %151 = vector.load %arg15[%c0_99, %c0_100] : memref<1x16xf32, #tpu.memory_space<vmem>>, vector<1x16xf32>
    %152 = arith.mulf %138, %150 : vector<1x16xf32>
    %153 = arith.subf %151, %152 : vector<1x16xf32>
    %154 = tpu.concatenate %150, %153 in 0 : vector<1x16xf32>, vector<1x16xf32> -> vector<2x16xf32>
    %c0_101 = arith.constant 0 : index
    %c0_102 = arith.constant 0 : index
    %155 = vector.load %arg9[%c0_101, %c0_102] : memref<16x48xf32, #tpu.memory_space<vmem>>, vector<16x48xf32>
    %cst_103 = arith.constant dense<0.000000e+00> : vector<2x48xf32>
    %156 = tpu.matmul %154, %155, %cst_103 {dimension_numbers = #tpu.dot_dimension_numbers<[1], [0], [0], [1], [0, 0, 1, 1], [], []>} : vector<2x16xf32>, vector<16x48xf32>, vector<2x48xf32> -> vector<2x48xf32>
    %157 = vector.extract_strided_slice %156 {offsets = [0, 0], sizes = [1, 48], strides = [1, 1]} : vector<2x48xf32> to vector<1x48xf32>
    %158 = vector.broadcast %157 : vector<1x48xf32> to vector<6x48xf32>
    %159 = arith.mulf %127, %158 : vector<6x48xf32>
    %160 = vector.extract_strided_slice %156 {offsets = [1, 0], sizes = [1, 48], strides = [1, 1]} : vector<2x48xf32> to vector<1x48xf32>
    %161 = vector.broadcast %160 : vector<1x48xf32> to vector<6x48xf32>
    %162 = arith.addf %159, %161 : vector<6x48xf32>
    %cst_104 = arith.constant 0.000000e+00 : f32
    %163 = vector.broadcast %cst_104 : f32 to vector<6x48xf32>
    %164 = arith.maximumf %162, %163 : vector<6x48xf32>
    %c0_105 = arith.constant 0 : index
    %c0_106 = arith.constant 0 : index
    %165 = vector.load %arg27[%c0_105, %c0_106] : memref<6x48xf32, #tpu.memory_space<vmem>>, vector<6x48xf32>
    tpu.vector_store %arg27[%c0_105, %c0_106], %164 {strides = array<i32>} : memref<6x48xf32, #tpu.memory_space<vmem>>, vector<6x48xf32>,
    %c0_107 = arith.constant 0 : index
    %c0_108 = arith.constant 0 : index
    %166 = tpu.strided_load %arg27[%c0_107, %c0_108] {strides = array<i32: 3, 1>} : memref<6x48xf32, #tpu.memory_space<vmem>>, vector<2x48xf32>
    %c1_109 = arith.constant 1 : index
    %c0_110 = arith.constant 0 : index
    %167 = tpu.strided_load %arg27[%c1_109, %c0_110] {strides = array<i32: 3, 1>} : memref<6x48xf32, #tpu.memory_space<vmem>>, vector<2x48xf32>
    %c2_111 = arith.constant 2 : index
    %c0_112 = arith.constant 0 : index
    %168 = tpu.strided_load %arg27[%c2_111, %c0_112] {strides = array<i32: 3, 1>} : memref<6x48xf32, #tpu.memory_space<vmem>>, vector<2x48xf32>
    %169 = tpu.concatenate %166, %167, %168 in 1 : vector<2x48xf32>, vector<2x48xf32>, vector<2x48xf32> -> vector<2x144xf32>
    %170 = arith.truncf %169 : vector<2x144xf32> to vector<2x144xbf16>
    %c0_113 = arith.constant 0 : index
    %c0_114 = arith.constant 0 : index
    %171 = vector.load %arg18[%c0_113, %c0_114] : memref<144x72xbf16, #tpu.memory_space<vmem>>, vector<144x72xbf16>
    %cst_115 = arith.constant dense<0.000000e+00> : vector<2x72xf32>
    %172 = tpu.matmul %170, %171, %cst_115 {dimension_numbers = #tpu.dot_dimension_numbers<[1], [0], [0], [1], [0, 0, 1, 1], [], []>} : vector<2x144xbf16>, vector<144x72xbf16>, vector<2x72xf32> -> vector<2x72xf32>
    %c0_116 = arith.constant 0 : index
    %c0_117 = arith.constant 0 : index
    %173 = vector.load %arg19[%c0_116, %c0_117] : memref<1x72xf32, #tpu.memory_space<vmem>>, vector<1x72xf32>
    %174 = vector.broadcast %173 : vector<1x72xf32> to vector<2x72xf32>
    %175 = arith.addf %172, %174 : vector<2x72xf32>
    %cst_118 = arith.constant 0.000000e+00 : f32
    %176 = vector.broadcast %cst_118 : f32 to vector<2x72xf32>
    %177 = arith.maximumf %175, %176 : vector<2x72xf32>
    %178 = arith.truncf %177 : vector<2x72xf32> to vector<2x72xbf16>
    %c0_119 = arith.constant 0 : index
    %c0_120 = arith.constant 0 : index
    %179 = vector.load %arg20[%c0_119, %c0_120] : memref<72x10xbf16, #tpu.memory_space<vmem>>, vector<72x10xbf16>
    %cst_121 = arith.constant dense<0.000000e+00> : vector<2x10xf32>
    %180 = tpu.matmul %178, %179, %cst_121 {dimension_numbers = #tpu.dot_dimension_numbers<[1], [0], [0], [1], [0, 0, 1, 1], [], []>} : vector<2x72xbf16>, vector<72x10xbf16>, vector<2x10xf32> -> vector<2x10xf32>
    %c0_122 = arith.constant 0 : index
    %c0_123 = arith.constant 0 : index
    %181 = vector.load %arg21[%c0_122, %c0_123] : memref<1x10xf32, #tpu.memory_space<vmem>>, vector<1x10xf32>
    %182 = vector.broadcast %181 : vector<1x10xf32> to vector<2x10xf32>
    %183 = arith.addf %180, %182 : vector<2x10xf32>
    %c0_124 = arith.constant 0 : index
    %c0_125 = arith.constant 0 : index
    %184 = vector.load %arg22[%c0_124, %c0_125] : memref<2x10xf32, #tpu.memory_space<vmem>>, vector<2x10xf32>
    tpu.vector_store %arg22[%c0_124, %c0_125], %183 {strides = array<i32>} : memref<2x10xf32, #tpu.memory_space<vmem>>, vector<2x10xf32>,
    return
  }
}

</mosaic_0001>

<llo_original>
// kernel: cnn_forward.1
$region0: #{cnn_forward.1}
  #allocation0 [shape = 'u32[]', space=smem, size = 0x4, offset = 0x4, fixed_abs, tag = 'smem constant byte address 0x4 - core index']
  #allocation1 [shape = 'u32[144,128]{1,0:T(1,128)}', space=vmem, size = 0x12000, scoped, tag = 'internal scratch']
  #allocation2 [shape = 'f32[56,112]{1,0:T(8,128)}', space=vmem, size = 0x7000, scoped, tag = 'scratch operand']
  #allocation3 [shape = 'f32[32,64]{1,0:T(8,128)}', space=vmem, size = 0x4000, scoped, tag = 'scratch operand']
  #allocation4 [shape = 'f32[28,112]{1,0:T(8,128)}', space=vmem, size = 0x4000, scoped, tag = 'scratch operand']
  #allocation5 [shape = 'f32[14,56]{1,0:T(8,128)}', space=vmem, size = 0x2000, scoped, tag = 'scratch operand']
  #allocation6 [shape = 'f32[6,48]{1,0:T(8,128)}', space=vmem, size = 0x1000, scoped, tag = 'scratch operand']
  %s0 = inlined_call_operand.vmem [shape: bf16[56,90], index: 0, kind: input, shape index: {}]
  %s1 = inlined_call_operand.vmem [shape: bf16[90,112], index: 1, kind: input, shape index: {}]
  %s2 = inlined_call_operand.vmem [shape: bf16[192,112], index: 2, kind: input, shape index: {}]
  %s3 = inlined_call_operand.vmem [shape: bf16[168,48], index: 3, kind: input, shape index: {}]
  %s4 = inlined_call_operand.vmem [shape: f32[112,4], index: 4, kind: input, shape index: {}]
  %s5 = inlined_call_operand.vmem [shape: f32[4,112], index: 5, kind: input, shape index: {}]
  %s6 = inlined_call_operand.vmem [shape: f32[112,8], index: 6, kind: input, shape index: {}]
  %s7 = inlined_call_operand.vmem [shape: f32[8,112], index: 7, kind: input, shape index: {}]
  %s8 = inlined_call_operand.vmem [shape: f32[48,16], index: 8, kind: input, shape index: {}]
  %s9 = inlined_call_operand.vmem [shape: f32[16,48], index: 9, kind: input, shape index: {}]
  %s10 = inlined_call_operand.vmem [shape: f32[1,4], index: 10, kind: input, shape index: {}]
  %s11 = inlined_call_operand.vmem [shape: f32[1,4], index: 11, kind: input, shape index: {}]
  %s12 = inlined_call_operand.vmem [shape: f32[1,8], index: 12, kind: input, shape index: {}]
  %s13 = inlined_call_operand.vmem [shape: f32[1,8], index: 13, kind: input, shape index: {}]
  %s14 = inlined_call_operand.vmem [shape: f32[1,16], index: 14, kind: input, shape index: {}]
  %s15 = inlined_call_operand.vmem [shape: f32[1,16], index: 15, kind: input, shape index: {}]
  %s16 = inlined_call_operand.vmem [shape: bf16[112,64], index: 16, kind: input, shape index: {}]
  %s17 = inlined_call_operand.vmem [shape: bf16[112,56], index: 17, kind: input, shape index: {}]
  %s18 = inlined_call_operand.vmem [shape: bf16[144,72], index: 18, kind: input, shape index: {}]
  %s19 = inlined_call_operand.vmem [shape: f32[1,72], index: 19, kind: input, shape index: {}]
  %s20 = inlined_call_operand.vmem [shape: bf16[72,10], index: 20, kind: input, shape index: {}]
  %s21 = inlined_call_operand.vmem [shape: f32[1,10], index: 21, kind: input, shape index: {}]
  %s22 = inlined_call_operand.hbm [shape: f32[2,10], index: 22, kind: output, shape index: {}]
  %s23 = sld [smem:[#allocation0]]
  $region98: #{cnn_forward.1} parent=0
    _
  %s25 = ssub.s32 1, %s23
  %s26 = scalar_select 0, %s25, %s23
  $region1: #{cnn_forward.1} parent=0
    #allocation7 [shape = 'u8[1024]{0}', space=vmem, size = 0x400, scoped, tag = 'output window, operand 0, single buffered']
    #allocation8 [shape = 's32[1]{0}', space=sflag, size = 0x4, scoped, tag = 'scoped memory for cnn_forward.1']
    %27 = vsyncpa [#allocation8], 0
    // Predicated region
    $region2: #{cnn_forward.1} parent=1 // pred_check
      _
    $region3: #{cnn_forward.1} parent=1 // pred_check_branch
      %29 = sbr.rel (0) target = $region5
    $region4: #{cnn_forward.1} parent=1 // pred_region
      _
    $region5: #{cnn_forward.1} parent=1 // pred_fallthru
      _
    // Predicated region
    $region6: #{cnn_forward.1} parent=1 // pred_check
      _
    $region7: #{cnn_forward.1} parent=1 // pred_check_branch
      %31 = sbr.rel (0) target = $region9
    $region8: #{cnn_forward.1} parent=1 // pred_region
      _
    $region9: #{cnn_forward.1} parent=1 // pred_fallthru
      _
    // Predicated region
    $region10: #{cnn_forward.1} parent=1 // pred_check
      _
    $region11: #{cnn_forward.1} parent=1 // pred_check_branch
      %33 = sbr.rel (0) target = $region13
    $region12: #{cnn_forward.1} parent=1 // pred_region
      _
    $region13: #{cnn_forward.1} parent=1 // pred_fallthru
      _
    // Predicated region
    $region14: #{cnn_forward.1} parent=1 // pred_check
      _
    $region15: #{cnn_forward.1} parent=1 // pred_check_branch
      %35 = sbr.rel (0) target = $region17
    $region16: #{cnn_forward.1} parent=1 // pred_region
      _
    $region17: #{cnn_forward.1} parent=1 // pred_fallthru
      _
    // Predicated region
    $region18: #{cnn_forward.1} parent=1 // pred_check
      _
    $region19: #{cnn_forward.1} parent=1 // pred_check_branch
      %37 = sbr.rel (0) target = $region21
    $region20: #{cnn_forward.1} parent=1 // pred_region
      _
    $region21: #{cnn_forward.1} parent=1 // pred_fallthru
      _
    // Predicated region
    $region22: #{cnn_forward.1} parent=1 // pred_check
      _
    $region23: #{cnn_forward.1} parent=1 // pred_check_branch
      %39 = sbr.rel (0) target = $region25
    $region24: #{cnn_forward.1} parent=1 // pred_region
      _
    $region25: #{cnn_forward.1} parent=1 // pred_fallthru
      _
    // Predicated region
    $region26: #{cnn_forward.1} parent=1 // pred_check
      _
    $region27: #{cnn_forward.1} parent=1 // pred_check_branch
      %41 = sbr.rel (0) target = $region29
    $region28: #{cnn_forward.1} parent=1 // pred_region
      _
    $region29: #{cnn_forward.1} parent=1 // pred_fallthru
      _
    // Predicated region
    $region30: #{cnn_forward.1} parent=1 // pred_check
      _
    $region31: #{cnn_forward.1} parent=1 // pred_check_branch
      %43 = sbr.rel (0) target = $region33
    $region32: #{cnn_forward.1} parent=1 // pred_region
      _
    $region33: #{cnn_forward.1} parent=1 // pred_fallthru
      _
    // Predicated region
    $region34: #{cnn_forward.1} parent=1 // pred_check
      _
    $region35: #{cnn_forward.1} parent=1 // pred_check_branch
      %45 = sbr.rel (0) target = $region37
    $region36: #{cnn_forward.1} parent=1 // pred_region
      _
    $region37: #{cnn_forward.1} parent=1 // pred_fallthru
      _
    // Predicated region
    $region38: #{cnn_forward.1} parent=1 // pred_check
      _
    $region39: #{cnn_forward.1} parent=1 // pred_check_branch
      %47 = sbr.rel (0) target = $region41
    $region40: #{cnn_forward.1} parent=1 // pred_region
      _
    $region41: #{cnn_forward.1} parent=1 // pred_fallthru
      _
    // Predicated region
    $region42: #{cnn_forward.1} parent=1 // pred_check
      _
    $region43: #{cnn_forward.1} parent=1 // pred_check_branch
      %49 = sbr.rel (0) target = $region45
    $region44: #{cnn_forward.1} parent=1 // pred_region
      _
    $region45: #{cnn_forward.1} parent=1 // pred_fallthru
      _
    // Predicated region
    $region46: #{cnn_forward.1} parent=1 // pred_check
      _
    $region47: #{cnn_forward.1} parent=1 // pred_check_branch
      %51 = sbr.rel (0) target = $region49
    $region48: #{cnn_forward.1} parent=1 // pred_region
      _
    $region49: #{cnn_forward.1} parent=1 // pred_fallthru
      _
    // Predicated region
    $region50: #{cnn_forward.1} parent=1 // pred_check
      _
    $region51: #{cnn_forward.1} parent=1 // pred_check_branch
      %53 = sbr.rel (0) target = $region53
    $region52: #{cnn_forward.1} parent=1 // pred_region
      _
    $region53: #{cnn_forward.1} parent=1 // pred_fallthru
      _
    // Predicated region
    $region54: #{cnn_forward.1} parent=1 // pred_check
      _
    $region55: #{cnn_forward.1} parent=1 // pred_check_branch
      %55 = sbr.rel (0) target = $region57
    $region56: #{cnn_forward.1} parent=1 // pred_region
      _
    $region57: #{cnn_forward.1} parent=1 // pred_fallthru
      _
    // Predicated region
    $region58: #{cnn_forward.1} parent=1 // pred_check
      _
    $region59: #{cnn_forward.1} parent=1 // pred_check_branch
      %57 = sbr.rel (0) target = $region61
    $region60: #{cnn_forward.1} parent=1 // pred_region
      _
    $region61: #{cnn_forward.1} parent=1 // pred_fallthru
      _
    // Predicated region
    $region62: #{cnn_forward.1} parent=1 // pred_check
      _
    $region63: #{cnn_forward.1} parent=1 // pred_check_branch
      %59 = sbr.rel (0) target = $region65
    $region64: #{cnn_forward.1} parent=1 // pred_region
      _
    $region65: #{cnn_forward.1} parent=1 // pred_fallthru
      _
    // Predicated region
    $region66: #{cnn_forward.1} parent=1 // pred_check
      _
    $region67: #{cnn_forward.1} parent=1 // pred_check_branch
      %61 = sbr.rel (0) target = $region69
    $region68: #{cnn_forward.1} parent=1 // pred_region
      _
    $region69: #{cnn_forward.1} parent=1 // pred_fallthru
      _
    // Predicated region
    $region70: #{cnn_forward.1} parent=1 // pred_check
      _
    $region71: #{cnn_forward.1} parent=1 // pred_check_branch
      %63 = sbr.rel (0) target = $region73
    $region72: #{cnn_forward.1} parent=1 // pred_region
      _
    $region73: #{cnn_forward.1} parent=1 // pred_fallthru
      _
    // Predicated region
    $region74: #{cnn_forward.1} parent=1 // pred_check
      _
    $region75: #{cnn_forward.1} parent=1 // pred_check_branch
      %65 = sbr.rel (0) target = $region77
    $region76: #{cnn_forward.1} parent=1 // pred_region
      _
    $region77: #{cnn_forward.1} parent=1 // pred_fallthru
      _
    // Predicated region
    $region78: #{cnn_forward.1} parent=1 // pred_check
      _
    $region79: #{cnn_forward.1} parent=1 // pred_check_branch
      %67 = sbr.rel (0) target = $region81
    $region80: #{cnn_forward.1} parent=1 // pred_region
      _
    $region81: #{cnn_forward.1} parent=1 // pred_fallthru
      _
    // Predicated region
    $region82: #{cnn_forward.1} parent=1 // pred_check
      _
    $region83: #{cnn_forward.1} parent=1 // pred_check_branch
      %69 = sbr.rel (0) target = $region85
    $region84: #{cnn_forward.1} parent=1 // pred_region
      _
    $region85: #{cnn_forward.1} parent=1 // pred_fallthru
      _
    // Predicated region
    $region86: #{cnn_forward.1} parent=1 // pred_check
      _
    $region87: #{cnn_forward.1} parent=1 // pred_check_branch
      %71 = sbr.rel (0) target = $region89
    $region88: #{cnn_forward.1} parent=1 // pred_region
      _
    $region89: #{cnn_forward.1} parent=1 // pred_fallthru
      _
    %v73 = vld [vmem:[%s0] sm:$0xf]
    %v74 = vld [vmem:[%s0 + $0x4] sm:$0xf]
    %v75 = vld [vmem:[%s0 + $0x8] sm:$0xf]
    %v76 = vld [vmem:[%s0 + $0xc] sm:$0xf]
    %v77 = vld [vmem:[%s0 + $0x10] sm:$0xf]
    %v78 = vld [vmem:[%s0 + $0x14] sm:$0xf]
    %v79 = vld [vmem:[%s0 + $0x18] sm:$0xf]
    %v80 = vld [vmem:[%s1] sm:$0xf]
    %v81 = vld [vmem:[%s1 + $0x4] sm:$0xf]
    %v82 = vld [vmem:[%s1 + $0x8] sm:$0xf]
    %v83 = vld [vmem:[%s1 + $0xc] sm:$0xf]
    %v84 = vld [vmem:[%s1 + $0x10] sm:$0xf]
    %v85 = vld [vmem:[%s1 + $0x14] sm:$0xf]
    %v86 = vld [vmem:[%s1 + $0x18] sm:$0xf]
    %v87 = vld [vmem:[%s1 + $0x1c] sm:$0xf]
    %v88 = vld [vmem:[%s1 + $0x20] sm:$0xf]
    %v89 = vld [vmem:[%s1 + $0x24] sm:$0xf]
    %v90 = vld [vmem:[%s1 + $0x28] sm:$0xf]
    %v91 = vld [vmem:[%s1 + $0x2c] sm:$0x1]
    %v99 = vunpack.c.l.b16 %v73
    %v100 = vunpack.c.l.b16 %v74
    %v101 = vunpack.c.l.b16 %v75
    %v102 = vunpack.c.l.b16 %v76
    %v103 = vunpack.c.l.b16 %v77
    %v104 = vunpack.c.l.b16 %v78
    %v105 = vunpack.c.l.b16 %v79
    %v106 = vpack.c.b16 %v100, %v99
    %v107 = vpack.c.b16 %v102, %v101
    %v108 = vpack.c.b16 %v104, %v103
    %v109 = vpack.c.b16 %v105, %v105
    %v122 = vunpack.c.l.b16 %v80
    %v123 = vunpack.c.l.b16 %v81
    %v124 = vunpack.c.l.b16 %v82
    %v125 = vunpack.c.l.b16 %v83
    %v126 = vunpack.c.l.b16 %v84
    %v127 = vunpack.c.l.b16 %v85
    %v128 = vunpack.c.l.b16 %v86
    %v129 = vunpack.c.l.b16 %v87
    %v130 = vunpack.c.l.b16 %v88
    %v131 = vunpack.c.l.b16 %v89
    %v132 = vunpack.c.l.b16 %v90
    %v133 = vunpack.c.l.b16 %v91
    %v134 = vpack.c.b16 %v123, %v122
    %v135 = vpack.c.b16 %v125, %v124
    %v136 = vpack.c.b16 %v127, %v126
    %v137 = vpack.c.b16 %v129, %v128
    %v138 = vpack.c.b16 %v131, %v130
    %v139 = vpack.c.b16 %v133, %v132
    %vm145 = vcmask 736256
    %v147 = vsel %vm145, %v106, 0
    %v150 = vsel %vm145, %v107, 0
    %v153 = vsel %vm145, %v108, 0
    %v156 = vsel %vm145, %v109, 0
    %vm158 = vcmask 1044480
    %v160 = vsel %vm158, %v139, 0
    %162 = vmatprep.subr.bf16.mxu0 0
    %163 = vmatpush1.bf16.msra.mxu0 %v134
    %164 = vmatprep.subr.bf16.mxu0 0
    %165 = vmatpush1.bf16.msra.mxu0 %v135
    %166 = vmatprep.subr.bf16.mxu0 0
    %167 = vmatpush1.bf16.msra.mxu0 %v136
    %168 = vmatprep.subr.bf16.mxu0 0
    %169 = vmatpush1.bf16.msra.mxu0 %v137
    %170 = vmatprep.subr.bf16.mxu0 0
    %171 = vmatpush1.bf16.msra.mxu0 %v138
    %172 = vmatprep.subr.bf16.mxu0 0
    %173 = vmatpush1.bf16.msra.mxu0 %v160
    %174 = vmatprep.subr.bf16.mxu0 0
    %175 = vmatpush1.bf16.msra.mxu0 0
    %176 = vmatprep.subr.bf16.mxu0 0
    %177 = vmatpush1.bf16.msra.mxu0 0
    %178 = vmatprep.subr.bf16.mxu0 0
    %179 = vmatpush1.bf16.msra.mxu0 0
    %180 = vmatprep.subr.bf16.mxu0 0
    %181 = vmatpush1.bf16.msra.mxu0 0
    %182 = vmatprep.subr.bf16.mxu0 0
    %183 = vmatpush1.bf16.msra.mxu0 0
    %184 = vmatprep.subr.bf16.mxu0 0
    %185 = vmatpush1.bf16.msra.mxu0 0
    %186 = vmatprep.subr.bf16.mxu0 0
    %187 = vmatpush1.bf16.msra.mxu0 0
    %188 = vmatprep.subr.bf16.mxu0 0
    %189 = vmatpush1.bf16.msra.mxu0 0
    %190 = vmatprep.subr.bf16.mxu0 0
    %191 = vmatpush1.bf16.msra.mxu0 0
    %192 = vmatprep.subr.bf16.mxu0 0
    %193 = vmatpush1.bf16.msra.mxu0 0
    %194 = vmatprep.mubr.bf16.mxu0 0
    %195 = vmatmul.mubr.bf16.gmra.mrb[0].mxu0 %v147
    %v196 = vpop.f32.mrb[0].mxu0
    %v197 = vadd.f32 0.0, %v196
    %v198 = vpop.f32.mrb[0].mxu0
    %v199 = vpop.f32.mrb[0].mxu0
    %v200 = vadd.f32 0.0, %v199
    %v201 = vpop.f32.mrb[0].mxu0
    %202 = vmatprep.mubr.bf16.mxu0 0
    %203 = vmatmul.mubr.bf16.gmra.mrb[0].mxu0 %v150
    %v204 = vpop.f32.mrb[0].mxu0
    %v205 = vadd.f32 0.0, %v204
    %v206 = vpop.f32.mrb[0].mxu0
    %v207 = vpop.f32.mrb[0].mxu0
    %v208 = vadd.f32 0.0, %v207
    %v209 = vpop.f32.mrb[0].mxu0
    %210 = vmatprep.mubr.bf16.mxu0 0
    %211 = vmatmul.mubr.bf16.gmra.mrb[0].mxu0 %v153
    %v212 = vpop.f32.mrb[0].mxu0
    %v213 = vadd.f32 0.0, %v212
    %v214 = vpop.f32.mrb[0].mxu0
    %v215 = vpop.f32.mrb[0].mxu0
    %v216 = vadd.f32 0.0, %v215
    %v217 = vpop.f32.mrb[0].mxu0
    %218 = vmatprep.mubr.bf16.mxu0 0
    %219 = vmatmul.mubr.bf16.gmra.mrb[0].mxu0 %v156
    %v220 = vpop.f32.mrb[0].mxu0
    %v221 = vadd.f32 0.0, %v220
    %v222 = vpop.f32.mrb[0].mxu0
    %v223 = vpop.f32.mrb[0].mxu0
    %v224 = vpop.f32.mrb[0].mxu0
    %225 = vdwg.mxu0
    %vm226 = vcmask 916480
    %v227 = vsel %vm226, %v197, 0.0
    %v228 = vsel %vm226, %v200, 0.0
    %v229 = vadd.f32 %v227, %v228
    %v230 = vsel %vm226, %v205, 0.0
    %v231 = vadd.f32 %v229, %v230
    %v232 = vsel %vm226, %v208, 0.0
    %v233 = vadd.f32 %v231, %v232
    %v234 = vsel %vm226, %v213, 0.0
    %v235 = vadd.f32 %v233, %v234
    %v236 = vsel %vm226, %v216, 0.0
    %v237 = vadd.f32 %v235, %v236
    %v238 = vsel %vm226, %v221, 0.0
    %v239 = vadd.f32 %v237, %v238
    %v240 = vrot.slane %v239, 4
    %v241 = vadd.f32 %v239, %v240
    %v242 = vrot.slane %v241, 2
    %v243 = vadd.f32 %v241, %v242
    %v244 = vrot.slane %v243, 1
    %v245 = vadd.f32 %v243, %v244
    %v246 = vmul.f32 %v197, %v197
    %v247 = vmul.f32 %v200, %v200
    %v248 = vmul.f32 %v205, %v205
    %v249 = vmul.f32 %v208, %v208
    %v250 = vmul.f32 %v213, %v213
    %v251 = vmul.f32 %v216, %v216
    %v252 = vmul.f32 %v221, %v221
    %v253 = vsel %vm226, %v246, 0.0
    %v254 = vsel %vm226, %v247, 0.0
    %v255 = vadd.f32 %v253, %v254
    %v256 = vsel %vm226, %v248, 0.0
    %v257 = vadd.f32 %v255, %v256
    %v258 = vsel %vm226, %v249, 0.0
    %v259 = vadd.f32 %v257, %v258
    %v260 = vsel %vm226, %v250, 0.0
    %v261 = vadd.f32 %v259, %v260
    %v262 = vsel %vm226, %v251, 0.0
    %v263 = vadd.f32 %v261, %v262
    %v264 = vsel %vm226, %v252, 0.0
    %v265 = vadd.f32 %v263, %v264
    %v266 = vrot.slane %v265, 4
    %v267 = vadd.f32 %v265, %v266
    %v268 = vrot.slane %v267, 2
    %v269 = vadd.f32 %v267, %v268
    %v270 = vrot.slane %v269, 1
    %v271 = vadd.f32 %v269, %v270
    %vm272 = vcmask 1040384
    %v273 = vsel %vm272, %v245, %v271
    %v274 = vld [vmem:[%s4] sm:$0xff]
    %v275 = vld [vmem:[%s4 + $0x8] sm:$0xff]
    %v276 = vld [vmem:[%s4 + $0x10] sm:$0xff]
    %v277 = vld [vmem:[%s4 + $0x18] sm:$0xff]
    %v278 = vld [vmem:[%s4 + $0x20] sm:$0xff]
    %v279 = vld [vmem:[%s4 + $0x28] sm:$0xff]
    %v280 = vld [vmem:[%s4 + $0x30] sm:$0xff]
    %v281 = vld [vmem:[%s4 + $0x38] sm:$0xff]
    %v282 = vld [vmem:[%s4 + $0x40] sm:$0xff]
    %v283 = vld [vmem:[%s4 + $0x48] sm:$0xff]
    %v284 = vld [vmem:[%s4 + $0x50] sm:$0xff]
    %v285 = vld [vmem:[%s4 + $0x58] sm:$0xff]
    %v286 = vld [vmem:[%s4 + $0x60] sm:$0xff]
    %v287 = vld [vmem:[%s4 + $0x68] sm:$0xff]
    %v289 = vsel %vm226, %v273, 0
    %291 = vmatprep.subr.mxu0 0.0
    %292 = vmatpush1.msra.mxu0 %v274
    %293 = vmatprep.subr.mxu0 0.0
    %294 = vmatpush1.msra.mxu0 %v275
    %295 = vmatprep.subr.mxu0 0.0
    %296 = vmatpush1.msra.mxu0 %v276
    %297 = vmatprep.subr.mxu0 0.0
    %298 = vmatpush1.msra.mxu0 %v277
    %299 = vmatprep.subr.mxu0 0.0
    %300 = vmatpush1.msra.mxu0 %v278
    %301 = vmatprep.subr.mxu0 0.0
    %302 = vmatpush1.msra.mxu0 %v279
    %303 = vmatprep.subr.mxu0 0.0
    %304 = vmatpush1.msra.mxu0 %v280
    %305 = vmatprep.subr.mxu0 0.0
    %306 = vmatpush1.msra.mxu0 %v281
    %307 = vmatprep.subr.mxu0 0.0
    %308 = vmatpush1.msra.mxu0 %v282
    %309 = vmatprep.subr.mxu0 0.0
    %310 = vmatpush1.msra.mxu0 %v283
    %311 = vmatprep.subr.mxu0 0.0
    %312 = vmatpush1.msra.mxu0 %v284
    %313 = vmatprep.subr.mxu0 0.0
    %314 = vmatpush1.msra.mxu0 %v285
    %315 = vmatprep.subr.mxu0 0.0
    %316 = vmatpush1.msra.mxu0 %v286
    %317 = vmatprep.subr.mxu0 0.0
    %318 = vmatpush1.msra.mxu0 %v287
    %319 = vmatprep.subr.mxu0 0.0
    %320 = vmatpush1.msra.mxu0 0.0
    %321 = vmatprep.subr.mxu0 0.0
    %322 = vmatpush1.msra.mxu0 0.0
    %323 = vmatprep.subr.mxu0 0.0
    %324 = vmatpush1.msra.mxu0 0.0
    %325 = vmatprep.subr.mxu0 0.0
    %326 = vmatpush1.msra.mxu0 0.0
    %327 = vmatprep.subr.mxu0 0.0
    %328 = vmatpush1.msra.mxu0 0.0
    %329 = vmatprep.subr.mxu0 0.0
    %330 = vmatpush1.msra.mxu0 0.0
    %331 = vmatprep.subr.mxu0 0.0
    %332 = vmatpush1.msra.mxu0 0.0
    %333 = vmatprep.subr.mxu0 0.0
    %334 = vmatpush1.msra.mxu0 0.0
    %335 = vmatprep.subr.mxu0 0.0
    %336 = vmatpush1.msra.mxu0 0.0
    %337 = vmatprep.subr.mxu0 0.0
    %338 = vmatpush1.msra.mxu0 0.0
    %339 = vmatprep.subr.mxu0 0.0
    %340 = vmatpush1.msra.mxu0 0.0
    %341 = vmatprep.subr.mxu0 0.0
    %342 = vmatpush1.msra.mxu0 0.0
    %343 = vmatprep.subr.mxu0 0.0
    %344 = vmatpush1.msra.mxu0 0.0
    %345 = vmatprep.subr.mxu0 0.0
    %346 = vmatpush1.msra.mxu0 0.0
    %347 = vmatprep.subr.mxu0 0.0
    %348 = vmatpush1.msra.mxu0 0.0
    %349 = vmatprep.subr.mxu0 0.0
    %350 = vmatpush1.msra.mxu0 0.0
    %351 = vmatprep.subr.mxu0 0.0
    %352 = vmatpush1.msra.mxu0 0.0
    %353 = vmatprep.subr.mxu0 0.0
    %354 = vmatpush1.msra.mxu0 0.0
    %355 = vmatprep.mubr.f32.mxu0 0.0
    %356 = vmatmul.mubr.f32.gmra.mrb[0].mxu0 %v289
    %v357 = vpop.f32.mrb[0].mxu0
    %v358 = vadd.f32 0.0, %v357
    %v359 = vpop.f32.mrb[0].mxu0
    %360 = vdwg.mxu0
    %v361 = vmul.f32 %v358, 0.0006377551
    %v362 = vmul.f32 %v361, %v361
    %v364 = vrot.slane %v362, 7
    %v366 = vsub.f32 %v361, %v364
    %v367 = vmax.f32 %v366, 0.0
    %v368 = vld [vmem:[%s10] sm:$0x1]
    %v369 = vadd.f32 %v367, 1e-05
    %v370 = vrsqrt.pop %v369
    %v373 = vunpack.c.l.s4 1966171168
    %v374 = vunpack.c.0.s8 %v373
    %v375 = vlaneseq
    %v376 = vshrl.u32 %v375, 7
    %v377 = vsub.s32 %v374, %v376
    %v378 = vrot.slane %v370, %v377
    %v379 = vcombine.high %v378, %v378
    %v381 = vunpack.c.l.s4 1966171168
    %v382 = vunpack.c.0.s8 %v381
    %v383 = vlaneseq
    %v384 = vshrl.u32 %v383, 7
    %v385 = vsub.s32 %v382, %v384
    %v386 = vrot.slane %v379, %v385
    %v388 = vmul.f32 %v368, %v386
    %v389 = vld [vmem:[%s11] sm:$0x1]
    %v390 = vmul.f32 %v361, %v388
    %v391 = vsub.f32 %v389, %v390
    %v393 = vlaneseq
    %v394 = vshrl.u32 %v393, 7
    %v395 = vsub.s32 0, %v394
    %v396 = vrot.slane %v391, %v395
    %v398 = vsel %vm272, %v388, %v396
    %v399 = vld [vmem:[%s5] sm:$0xf]
    %vm400 = vcmask 31744
    %v402 = vsel %vm400, %v398, 0
    %vm404 = vcmask 1043456
    %v406 = vsel %vm404, %v399, 0
    %408 = vmatprep.subr.mxu0 0.0
    %409 = vmatpush1.msra.mxu0 %v406
    %410 = vmatprep.subr.mxu0 0.0
    %411 = vmatpush1.msra.mxu0 0.0
    %412 = vmatprep.subr.mxu0 0.0
    %413 = vmatpush1.msra.mxu0 0.0
    %414 = vmatprep.subr.mxu0 0.0
    %415 = vmatpush1.msra.mxu0 0.0
    %416 = vmatprep.subr.mxu0 0.0
    %417 = vmatpush1.msra.mxu0 0.0
    %418 = vmatprep.subr.mxu0 0.0
    %419 = vmatpush1.msra.mxu0 0.0
    %420 = vmatprep.subr.mxu0 0.0
    %421 = vmatpush1.msra.mxu0 0.0
    %422 = vmatprep.subr.mxu0 0.0
    %423 = vmatpush1.msra.mxu0 0.0
    %424 = vmatprep.subr.mxu0 0.0
    %425 = vmatpush1.msra.mxu0 0.0
    %426 = vmatprep.subr.mxu0 0.0
    %427 = vmatpush1.msra.mxu0 0.0
    %428 = vmatprep.subr.mxu0 0.0
    %429 = vmatpush1.msra.mxu0 0.0
    %430 = vmatprep.subr.mxu0 0.0
    %431 = vmatpush1.msra.mxu0 0.0
    %432 = vmatprep.subr.mxu0 0.0
    %433 = vmatpush1.msra.mxu0 0.0
    %434 = vmatprep.subr.mxu0 0.0
    %435 = vmatpush1.msra.mxu0 0.0
    %436 = vmatprep.subr.mxu0 0.0
    %437 = vmatpush1.msra.mxu0 0.0
    %438 = vmatprep.subr.mxu0 0.0
    %439 = vmatpush1.msra.mxu0 0.0
    %440 = vmatprep.subr.mxu0 0.0
    %441 = vmatpush1.msra.mxu0 0.0
    %442 = vmatprep.subr.mxu0 0.0
    %443 = vmatpush1.msra.mxu0 0.0
    %444 = vmatprep.subr.mxu0 0.0
    %445 = vmatpush1.msra.mxu0 0.0
    %446 = vmatprep.subr.mxu0 0.0
    %447 = vmatpush1.msra.mxu0 0.0
    %448 = vmatprep.subr.mxu0 0.0
    %449 = vmatpush1.msra.mxu0 0.0
    %450 = vmatprep.subr.mxu0 0.0
    %451 = vmatpush1.msra.mxu0 0.0
    %452 = vmatprep.subr.mxu0 0.0
    %453 = vmatpush1.msra.mxu0 0.0
    %454 = vmatprep.subr.mxu0 0.0
    %455 = vmatpush1.msra.mxu0 0.0
    %456 = vmatprep.subr.mxu0 0.0
    %457 = vmatpush1.msra.mxu0 0.0
    %458 = vmatprep.subr.mxu0 0.0
    %459 = vmatpush1.msra.mxu0 0.0
    %460 = vmatprep.subr.mxu0 0.0
    %461 = vmatpush1.msra.mxu0 0.0
    %462 = vmatprep.subr.mxu0 0.0
    %463 = vmatpush1.msra.mxu0 0.0
    %464 = vmatprep.subr.mxu0 0.0
    %465 = vmatpush1.msra.mxu0 0.0
    %466 = vmatprep.subr.mxu0 0.0
    %467 = vmatpush1.msra.mxu0 0.0
    %468 = vmatprep.subr.mxu0 0.0
    %469 = vmatpush1.msra.mxu0 0.0
    %470 = vmatprep.subr.mxu0 0.0
    %471 = vmatpush1.msra.mxu0 0.0
    %472 = vmatprep.mubr.f32.mxu0 0.0
    %473 = vmatmul.mubr.f32.gmra.mrb[0].mxu0 %v402
    %v474 = vpop.f32.mrb[0].mxu0
    %v475 = vadd.f32 0.0, %v474
    %v476 = vpop.f32.mrb[0].mxu0
    %477 = vdwg.mxu0
    %v478 = vlaneseq
    %v479 = vshrl.u32 %v478, 7
    %v480 = vsub.s32 0, %v479
    %v481 = vrot.slane %v475, %v480
    %v482 = vmul.f32 %v197, %v481
    %v483 = vmul.f32 %v200, %v481
    %v484 = vmul.f32 %v205, %v481
    %v485 = vmul.f32 %v208, %v481
    %v486 = vmul.f32 %v213, %v481
    %v487 = vmul.f32 %v216, %v481
    %v488 = vmul.f32 %v221, %v481
    %v489 = vlaneseq
    %v490 = vshrl.u32 %v489, 7
    %v491 = vsub.s32 1, %v490
    %v492 = vrot.slane %v475, %v491
    %v493 = vadd.f32 %v482, %v492
    %v494 = vadd.f32 %v483, %v492
    %v495 = vadd.f32 %v484, %v492
    %v496 = vadd.f32 %v485, %v492
    %v497 = vadd.f32 %v486, %v492
    %v498 = vadd.f32 %v487, %v492
    %v499 = vadd.f32 %v488, %v492
    %v500 = vmax.f32 %v493, 0.0
    %v501 = vmax.f32 %v494, 0.0
    %v502 = vmax.f32 %v495, 0.0
    %v503 = vmax.f32 %v496, 0.0
    %v504 = vmax.f32 %v497, 0.0
    %v505 = vmax.f32 %v498, 0.0
    %v506 = vmax.f32 %v499, 0.0
    %507 = vst.msk [vmem:[#allocation2] sm:$0xff] %vm226, %v500
    %508 = vst.msk [vmem:[#allocation2 + $0x8] sm:$0xff] %vm226, %v501
    %509 = vst.msk [vmem:[#allocation2 + $0x10] sm:$0xff] %vm226, %v502
    %510 = vst.msk [vmem:[#allocation2 + $0x18] sm:$0xff] %vm226, %v503
    %511 = vst.msk [vmem:[#allocation2 + $0x20] sm:$0xff] %vm226, %v504
    %512 = vst.msk [vmem:[#allocation2 + $0x28] sm:$0xff] %vm226, %v505
    %513 = vst.msk [vmem:[#allocation2 + $0x30] sm:$0xff] %vm226, %v506
    %v514 = vld [vmem:[#allocation2] ss:$2 sm:$0xff]
    %s515 = scalar_lea.vmem [#allocation2], 16
    %v516 = vld [vmem:[%s515] ss:$2 sm:$0xff]
    %s517 = scalar_lea.vmem [#allocation2], 32
    %v518 = vld [vmem:[%s517] ss:$2 sm:$0xff]
    %s519 = scalar_lea.vmem [#allocation2], 48
    %v520 = vld [vmem:[%s519] ss:$2 sm:$0xf]
    %s521 = scalar_lea.vmem [#allocation2], 1
    %v522 = vld [vmem:[%s521] ss:$2 sm:$0xff]
    %s523 = scalar_lea.vmem [#allocation2], 17
    %v524 = vld [vmem:[%s523] ss:$2 sm:$0xff]
    %s525 = scalar_lea.vmem [#allocation2], 33
    %v526 = vld [vmem:[%s525] ss:$2 sm:$0xff]
    %s527 = scalar_lea.vmem [#allocation2], 49
    %v528 = vld [vmem:[%s527] ss:$2 sm:$0xf]
    %v529 = vadd.f32 %v514, %v522
    %v530 = vadd.f32 %v516, %v524
    %v531 = vadd.f32 %v518, %v526
    %v532 = vadd.f32 %v520, %v528
    %v533 = vmul.f32 %v529, 0.5
    %v534 = vmul.f32 %v530, 0.5
    %v535 = vmul.f32 %v531, 0.5
    %v536 = vmul.f32 %v532, 0.5
    %v537 = vpack.c.bf16 %v534, %v533
    %v538 = vpack.c.bf16 %v536, %v535
    %v539 = vld [vmem:[%s16] sm:$0xf]
    %v540 = vld [vmem:[%s16 + $0x4] sm:$0xf]
    %v541 = vld [vmem:[%s16 + $0x8] sm:$0xf]
    %v542 = vld [vmem:[%s16 + $0xc] sm:$0xf]
    %v543 = vld [vmem:[%s16 + $0x10] sm:$0xf]
    %v544 = vld [vmem:[%s16 + $0x14] sm:$0xf]
    %v545 = vld [vmem:[%s16 + $0x18] sm:$0xf]
    %v546 = vld [vmem:[%s16 + $0x1c] sm:$0xf]
    %v547 = vld [vmem:[%s16 + $0x20] sm:$0xf]
    %v548 = vld [vmem:[%s16 + $0x24] sm:$0xf]
    %v549 = vld [vmem:[%s16 + $0x28] sm:$0xf]
    %v550 = vld [vmem:[%s16 + $0x2c] sm:$0xf]
    %v551 = vld [vmem:[%s16 + $0x30] sm:$0xf]
    %v552 = vld [vmem:[%s16 + $0x34] sm:$0xf]
    %v567 = vunpack.c.l.b16 %v539
    %v568 = vunpack.c.l.b16 %v540
    %v569 = vunpack.c.l.b16 %v541
    %v570 = vunpack.c.l.b16 %v542
    %v571 = vunpack.c.l.b16 %v543
    %v572 = vunpack.c.l.b16 %v544
    %v573 = vunpack.c.l.b16 %v545
    %v574 = vunpack.c.l.b16 %v546
    %v575 = vunpack.c.l.b16 %v547
    %v576 = vunpack.c.l.b16 %v548
    %v577 = vunpack.c.l.b16 %v549
    %v578 = vunpack.c.l.b16 %v550
    %v579 = vunpack.c.l.b16 %v551
    %v580 = vunpack.c.l.b16 %v552
    %v581 = vpack.c.b16 %v568, %v567
    %v582 = vpack.c.b16 %v570, %v569
    %v583 = vpack.c.b16 %v572, %v571
    %v584 = vpack.c.b16 %v574, %v573
    %v585 = vpack.c.b16 %v576, %v575
    %v586 = vpack.c.b16 %v578, %v577
    %v587 = vpack.c.b16 %v580, %v579
    %v596 = vsel %vm226, %v537, 0
    %v599 = vsel %vm226, %v538, 0
    %601 = vmatprep.subr.bf16.mxu0 0
    %602 = vmatpush1.bf16.msra.mxu0 %v581
    %603 = vmatprep.subr.bf16.mxu0 0
    %604 = vmatpush1.bf16.msra.mxu0 %v582
    %605 = vmatprep.subr.bf16.mxu0 0
    %606 = vmatpush1.bf16.msra.mxu0 %v583
    %607 = vmatprep.subr.bf16.mxu0 0
    %608 = vmatpush1.bf16.msra.mxu0 %v584
    %609 = vmatprep.subr.bf16.mxu0 0
    %610 = vmatpush1.bf16.msra.mxu0 %v585
    %611 = vmatprep.subr.bf16.mxu0 0
    %612 = vmatpush1.bf16.msra.mxu0 %v586
    %613 = vmatprep.subr.bf16.mxu0 0
    %614 = vmatpush1.bf16.msra.mxu0 %v587
    %615 = vmatprep.subr.bf16.mxu0 0
    %616 = vmatpush1.bf16.msra.mxu0 0
    %617 = vmatprep.subr.bf16.mxu0 0
    %618 = vmatpush1.bf16.msra.mxu0 0
    %619 = vmatprep.subr.bf16.mxu0 0
    %620 = vmatpush1.bf16.msra.mxu0 0
    %621 = vmatprep.subr.bf16.mxu0 0
    %622 = vmatpush1.bf16.msra.mxu0 0
    %623 = vmatprep.subr.bf16.mxu0 0
    %624 = vmatpush1.bf16.msra.mxu0 0
    %625 = vmatprep.subr.bf16.mxu0 0
    %626 = vmatpush1.bf16.msra.mxu0 0
    %627 = vmatprep.subr.bf16.mxu0 0
    %628 = vmatpush1.bf16.msra.mxu0 0
    %629 = vmatprep.subr.bf16.mxu0 0
    %630 = vmatpush1.bf16.msra.mxu0 0
    %631 = vmatprep.subr.bf16.mxu0 0
    %632 = vmatpush1.bf16.msra.mxu0 0
    %633 = vmatprep.mubr.bf16.mxu0 0
    %634 = vmatmul.mubr.bf16.gmra.mrb[0].mxu0 %v596
    %v635 = vpop.f32.mrb[0].mxu0
    %v636 = vadd.f32 0.0, %v635
    %v637 = vpop.f32.mrb[0].mxu0
    %v638 = vpop.f32.mrb[0].mxu0
    %v639 = vadd.f32 0.0, %v638
    %v640 = vpop.f32.mrb[0].mxu0
    %641 = vmatprep.mubr.bf16.mxu0 0
    %642 = vmatmul.mubr.bf16.gmra.mrb[0].mxu0 %v599
    %v643 = vpop.f32.mrb[0].mxu0
    %v644 = vadd.f32 0.0, %v643
    %v645 = vpop.f32.mrb[0].mxu0
    %v646 = vpop.f32.mrb[0].mxu0
    %v647 = vadd.f32 0.0, %v646
    %v648 = vpop.f32.mrb[0].mxu0
    %649 = vdwg.mxu0
    %vm650 = vcmask 523264
    %651 = vst.msk [vmem:[#allocation3] sm:$0xff] %vm650, 0.0
    %652 = vst.msk [vmem:[#allocation3 + $0x8] sm:$0xff] %vm650, 0.0
    %653 = vst.msk [vmem:[#allocation3 + $0x10] sm:$0xff] %vm650, 0.0
    %654 = vst.msk [vmem:[#allocation3 + $0x18] sm:$0xff] %vm650, 0.0
    %655 = vst.msk [vmem:[#allocation3 + $0x1] sm:$0xff] %vm650, %v636
    %vm656 = vcmask 521216
    %657 = vst.msk [vmem:[#allocation3 + $0x9] sm:$0x3f] %vm656, %v639
    %vm658 = vcmask 523270
    %659 = vst.msk [vmem:[#allocation3 + $0xb] sm:$0xc0] %vm658, %v639
    %660 = vst.msk [vmem:[#allocation3 + $0x13] sm:$0xff] %vm650, %v644
    %vm661 = vcmask 519168
    %662 = vst.msk [vmem:[#allocation3 + $0x1b] sm:$0xf] %vm661, %v647
    %v663 = vld [vmem:[#allocation3] sm:$0xff]
    %v664 = vld [vmem:[#allocation3 + $0x8] sm:$0x3f]
    %v665 = vld [vmem:[#allocation3 + $0x10] sm:$0xff]
    %v666 = vld [vmem:[#allocation3 + $0x18] sm:$0x3f]
    %vm669 = vcmask 1045504
    %v670 = vrot.slane %v665, 2
    %v671 = vrot.slane %v666, 2
    %v672 = vsel %vm669, %v670, %v671
    %v676 = vsel %vm669, %v664, %v670
    %v677 = vld [vmem:[#allocation3 + $0x1] sm:$0xff]
    %v678 = vld [vmem:[#allocation3 + $0x9] sm:$0x3f]
    %v679 = vld [vmem:[#allocation3 + $0x11] sm:$0xff]
    %v680 = vld [vmem:[#allocation3 + $0x19] sm:$0x3f]
    %v683 = vrot.slane %v679, 2
    %v684 = vrot.slane %v680, 2
    %v685 = vsel %vm669, %v683, %v684
    %v687 = vsel %vm669, %v678, %v683
    %v688 = vld [vmem:[#allocation3 + $0x2] sm:$0xff]
    %v689 = vld [vmem:[#allocation3 + $0xa] sm:$0x3f]
    %v690 = vld [vmem:[#allocation3 + $0x12] sm:$0xff]
    %v691 = vld [vmem:[#allocation3 + $0x1a] sm:$0x3f]
    %v694 = vrot.slane %v690, 2
    %v695 = vrot.slane %v691, 2
    %v696 = vsel %vm669, %v694, %v695
    %v700 = vsel %vm669, %v689, %v694
    %703 = vrot.lane.b32.xlu0 %v677, 64
    %v704 = vpop.permute.xlu0 %703
    %705 = vrot.lane.b32.xlu0 %v687, 64
    %v706 = vpop.permute.xlu0 %705
    %707 = vrot.lane.b32.xlu0 %v685, 64
    %v708 = vpop.permute.xlu0 %707
    %709 = vrot.lane.b32.xlu0 %v684, 64
    %v710 = vpop.permute.xlu0 %709
    %v715 = vsel %vm650, %v663, %v704
    %v716 = vsel %vm650, %v676, %v706
    %v717 = vsel %vm650, %v672, %v708
    %v718 = vsel %vm650, %v671, %v710
    %v719 = vpack.c.bf16 %v716, %v715
    %v720 = vpack.c.bf16 %v700, %v688
    %v721 = vpack.c.bf16 %v718, %v717
    %v722 = vpack.c.bf16 %v695, %v696
    %v723 = vld [vmem:[%s2] sm:$0xf]
    %v724 = vld [vmem:[%s2 + $0x4] sm:$0xf]
    %v725 = vld [vmem:[%s2 + $0x8] sm:$0xf]
    %v726 = vld [vmem:[%s2 + $0xc] sm:$0xf]
    %v727 = vld [vmem:[%s2 + $0x10] sm:$0xf]
    %v728 = vld [vmem:[%s2 + $0x14] sm:$0xf]
    %v729 = vld [vmem:[%s2 + $0x18] sm:$0xf]
    %v730 = vld [vmem:[%s2 + $0x1c] sm:$0xf]
    %v731 = vld [vmem:[%s2 + $0x20] sm:$0xf]
    %v732 = vld [vmem:[%s2 + $0x24] sm:$0xf]
    %v733 = vld [vmem:[%s2 + $0x28] sm:$0xf]
    %v734 = vld [vmem:[%s2 + $0x2c] sm:$0xf]
    %v735 = vld [vmem:[%s2 + $0x30] sm:$0xf]
    %v736 = vld [vmem:[%s2 + $0x34] sm:$0xf]
    %v737 = vld [vmem:[%s2 + $0x38] sm:$0xf]
    %v738 = vld [vmem:[%s2 + $0x3c] sm:$0xf]
    %v739 = vld [vmem:[%s2 + $0x40] sm:$0xf]
    %v740 = vld [vmem:[%s2 + $0x44] sm:$0xf]
    %v741 = vld [vmem:[%s2 + $0x48] sm:$0xf]
    %v742 = vld [vmem:[%s2 + $0x4c] sm:$0xf]
    %v743 = vld [vmem:[%s2 + $0x50] sm:$0xf]
    %v744 = vld [vmem:[%s2 + $0x54] sm:$0xf]
    %v745 = vld [vmem:[%s2 + $0x58] sm:$0xf]
    %v746 = vld [vmem:[%s2 + $0x5c] sm:$0xf]
    %v771 = vunpack.c.l.b16 %v723
    %v772 = vunpack.c.l.b16 %v724
    %v773 = vunpack.c.l.b16 %v725
    %v774 = vunpack.c.l.b16 %v726
    %v775 = vunpack.c.l.b16 %v727
    %v776 = vunpack.c.l.b16 %v728
    %v777 = vunpack.c.l.b16 %v729
    %v778 = vunpack.c.l.b16 %v730
    %v779 = vunpack.c.l.b16 %v731
    %v780 = vunpack.c.l.b16 %v732
    %v781 = vunpack.c.l.b16 %v733
    %v782 = vunpack.c.l.b16 %v734
    %v783 = vunpack.c.l.b16 %v735
    %v784 = vunpack.c.l.b16 %v736
    %v785 = vunpack.c.l.b16 %v737
    %v786 = vunpack.c.l.b16 %v738
    %v787 = vunpack.c.l.b16 %v739
    %v788 = vunpack.c.l.b16 %v740
    %v789 = vunpack.c.l.b16 %v741
    %v790 = vunpack.c.l.b16 %v742
    %v791 = vunpack.c.l.b16 %v743
    %v792 = vunpack.c.l.b16 %v744
    %v793 = vunpack.c.l.b16 %v745
    %v794 = vunpack.c.l.b16 %v746
    %v795 = vpack.c.b16 %v772, %v771
    %v796 = vpack.c.b16 %v774, %v773
    %v797 = vpack.c.b16 %v776, %v775
    %v798 = vpack.c.b16 %v778, %v777
    %v799 = vpack.c.b16 %v780, %v779
    %v800 = vpack.c.b16 %v782, %v781
    %v801 = vpack.c.b16 %v784, %v783
    %v802 = vpack.c.b16 %v786, %v785
    %v803 = vpack.c.b16 %v788, %v787
    %v804 = vpack.c.b16 %v790, %v789
    %v805 = vpack.c.b16 %v792, %v791
    %v806 = vpack.c.b16 %v794, %v793
    %v820 = vsel %vm650, %v720, 0
    %v823 = vsel %vm650, %v722, 0
    %825 = vmatprep.subr.bf16.mxu0 0
    %826 = vmatpush1.bf16.msra.mxu0 %v795
    %827 = vmatprep.subr.bf16.mxu0 0
    %828 = vmatpush1.bf16.msra.mxu0 %v796
    %829 = vmatprep.subr.bf16.mxu0 0
    %830 = vmatpush1.bf16.msra.mxu0 %v797
    %831 = vmatprep.subr.bf16.mxu0 0
    %832 = vmatpush1.bf16.msra.mxu0 %v798
    %833 = vmatprep.subr.bf16.mxu0 0
    %834 = vmatpush1.bf16.msra.mxu0 %v799
    %835 = vmatprep.subr.bf16.mxu0 0
    %836 = vmatpush1.bf16.msra.mxu0 %v800
    %837 = vmatprep.subr.bf16.mxu0 0
    %838 = vmatpush1.bf16.msra.mxu0 %v801
    %839 = vmatprep.subr.bf16.mxu0 0
    %840 = vmatpush1.bf16.msra.mxu0 %v802
    %841 = vmatprep.subr.bf16.mxu0 0
    %842 = vmatpush1.bf16.msra.mxu0 %v803
    %843 = vmatprep.subr.bf16.mxu0 0
    %844 = vmatpush1.bf16.msra.mxu0 %v804
    %845 = vmatprep.subr.bf16.mxu0 0
    %846 = vmatpush1.bf16.msra.mxu0 %v805
    %847 = vmatprep.subr.bf16.mxu0 0
    %848 = vmatpush1.bf16.msra.mxu0 %v806
    %849 = vmatprep.subr.bf16.mxu0 0
    %850 = vmatpush1.bf16.msra.mxu0 0
    %851 = vmatprep.subr.bf16.mxu0 0
    %852 = vmatpush1.bf16.msra.mxu0 0
    %853 = vmatprep.subr.bf16.mxu0 0
    %854 = vmatpush1.bf16.msra.mxu0 0
    %855 = vmatprep.subr.bf16.mxu0 0
    %856 = vmatpush1.bf16.msra.mxu0 0
    %857 = vmatprep.mubr.bf16.mxu0 %v820
    %858 = vmatmul.mubr.bf16.gmra.mrb[0].mxu0 %v719
    %v859 = vpop.f32.mrb[0].mxu0
    %v860 = vadd.f32 0.0, %v859
    %v861 = vpop.f32.mrb[0].mxu0
    %v862 = vpop.f32.mrb[0].mxu0
    %v863 = vadd.f32 0.0, %v862
    %v864 = vpop.f32.mrb[0].mxu0
    %865 = vmatprep.mubr.bf16.mxu0 %v823
    %866 = vmatmul.mubr.bf16.gmra.mrb[0].mxu0 %v721
    %v867 = vpop.f32.mrb[0].mxu0
    %v868 = vadd.f32 0.0, %v867
    %v869 = vpop.f32.mrb[0].mxu0
    %v870 = vpop.f32.mrb[0].mxu0
    %v871 = vadd.f32 0.0, %v870
    %v872 = vpop.f32.mrb[0].mxu0
    %873 = vdwg.mxu0
    %v874 = vsel %vm226, %v860, 0.0
    %v875 = vsel %vm226, %v863, 0.0
    %v876 = vadd.f32 %v874, %v875
    %v877 = vsel %vm226, %v868, 0.0
    %v878 = vadd.f32 %v876, %v877
    %vm879 = vcmask 912384
    %v880 = vsel %vm879, %v871, 0.0
    %v881 = vadd.f32 %v878, %v880
    %v882 = vrot.slane %v881, 4
    %v883 = vadd.f32 %v881, %v882
    %v884 = vrot.slane %v883, 2
    %v885 = vadd.f32 %v883, %v884
    %v886 = vrot.slane %v885, 1
    %v887 = vadd.f32 %v885, %v886
    %v888 = vmul.f32 %v860, %v860
    %v889 = vmul.f32 %v863, %v863
    %v890 = vmul.f32 %v868, %v868
    %v891 = vmul.f32 %v871, %v871
    %v892 = vsel %vm226, %v888, 0.0
    %v893 = vsel %vm226, %v889, 0.0
    %v894 = vadd.f32 %v892, %v893
    %v895 = vsel %vm226, %v890, 0.0
    %v896 = vadd.f32 %v894, %v895
    %v897 = vsel %vm879, %v891, 0.0
    %v898 = vadd.f32 %v896, %v897
    %v899 = vrot.slane %v898, 4
    %v900 = vadd.f32 %v898, %v899
    %v901 = vrot.slane %v900, 2
    %v902 = vadd.f32 %v900, %v901
    %v903 = vrot.slane %v902, 1
    %v904 = vadd.f32 %v902, %v903
    %v905 = vsel %vm272, %v887, %v904
    %v906 = vld [vmem:[%s6] sm:$0xff]
    %v907 = vld [vmem:[%s6 + $0x8] sm:$0xff]
    %v908 = vld [vmem:[%s6 + $0x10] sm:$0xff]
    %v909 = vld [vmem:[%s6 + $0x18] sm:$0xff]
    %v910 = vld [vmem:[%s6 + $0x20] sm:$0xff]
    %v911 = vld [vmem:[%s6 + $0x28] sm:$0xff]
    %v912 = vld [vmem:[%s6 + $0x30] sm:$0xff]
    %v913 = vld [vmem:[%s6 + $0x38] sm:$0xff]
    %v914 = vld [vmem:[%s6 + $0x40] sm:$0xff]
    %v915 = vld [vmem:[%s6 + $0x48] sm:$0xff]
    %v916 = vld [vmem:[%s6 + $0x50] sm:$0xff]
    %v917 = vld [vmem:[%s6 + $0x58] sm:$0xff]
    %v918 = vld [vmem:[%s6 + $0x60] sm:$0xff]
    %v919 = vld [vmem:[%s6 + $0x68] sm:$0xff]
    %v921 = vsel %vm226, %v905, 0
    %923 = vmatprep.subr.mxu0 0.0
    %924 = vmatpush1.msra.mxu0 %v906
    %925 = vmatprep.subr.mxu0 0.0
    %926 = vmatpush1.msra.mxu0 %v907
    %927 = vmatprep.subr.mxu0 0.0
    %928 = vmatpush1.msra.mxu0 %v908
    %929 = vmatprep.subr.mxu0 0.0
    %930 = vmatpush1.msra.mxu0 %v909
    %931 = vmatprep.subr.mxu0 0.0
    %932 = vmatpush1.msra.mxu0 %v910
    %933 = vmatprep.subr.mxu0 0.0
    %934 = vmatpush1.msra.mxu0 %v911
    %935 = vmatprep.subr.mxu0 0.0
    %936 = vmatpush1.msra.mxu0 %v912
    %937 = vmatprep.subr.mxu0 0.0
    %938 = vmatpush1.msra.mxu0 %v913
    %939 = vmatprep.subr.mxu0 0.0
    %940 = vmatpush1.msra.mxu0 %v914
    %941 = vmatprep.subr.mxu0 0.0
    %942 = vmatpush1.msra.mxu0 %v915
    %943 = vmatprep.subr.mxu0 0.0
    %944 = vmatpush1.msra.mxu0 %v916
    %945 = vmatprep.subr.mxu0 0.0
    %946 = vmatpush1.msra.mxu0 %v917
    %947 = vmatprep.subr.mxu0 0.0
    %948 = vmatpush1.msra.mxu0 %v918
    %949 = vmatprep.subr.mxu0 0.0
    %950 = vmatpush1.msra.mxu0 %v919
    %951 = vmatprep.subr.mxu0 0.0
    %952 = vmatpush1.msra.mxu0 0.0
    %953 = vmatprep.subr.mxu0 0.0
    %954 = vmatpush1.msra.mxu0 0.0
    %955 = vmatprep.subr.mxu0 0.0
    %956 = vmatpush1.msra.mxu0 0.0
    %957 = vmatprep.subr.mxu0 0.0
    %958 = vmatpush1.msra.mxu0 0.0
    %959 = vmatprep.subr.mxu0 0.0
    %960 = vmatpush1.msra.mxu0 0.0
    %961 = vmatprep.subr.mxu0 0.0
    %962 = vmatpush1.msra.mxu0 0.0
    %963 = vmatprep.subr.mxu0 0.0
    %964 = vmatpush1.msra.mxu0 0.0
    %965 = vmatprep.subr.mxu0 0.0
    %966 = vmatpush1.msra.mxu0 0.0
    %967 = vmatprep.subr.mxu0 0.0
    %968 = vmatpush1.msra.mxu0 0.0
    %969 = vmatprep.subr.mxu0 0.0
    %970 = vmatpush1.msra.mxu0 0.0
    %971 = vmatprep.subr.mxu0 0.0
    %972 = vmatpush1.msra.mxu0 0.0
    %973 = vmatprep.subr.mxu0 0.0
    %974 = vmatpush1.msra.mxu0 0.0
    %975 = vmatprep.subr.mxu0 0.0
    %976 = vmatpush1.msra.mxu0 0.0
    %977 = vmatprep.subr.mxu0 0.0
    %978 = vmatpush1.msra.mxu0 0.0
    %979 = vmatprep.subr.mxu0 0.0
    %980 = vmatpush1.msra.mxu0 0.0
    %981 = vmatprep.subr.mxu0 0.0
    %982 = vmatpush1.msra.mxu0 0.0
    %983 = vmatprep.subr.mxu0 0.0
    %984 = vmatpush1.msra.mxu0 0.0
    %985 = vmatprep.subr.mxu0 0.0
    %986 = vmatpush1.msra.mxu0 0.0
    %987 = vmatprep.mubr.f32.mxu0 0.0
    %988 = vmatmul.mubr.f32.gmra.mrb[0].mxu0 %v921
    %v989 = vpop.f32.mrb[0].mxu0
    %v990 = vadd.f32 0.0, %v989
    %v991 = vpop.f32.mrb[0].mxu0
    %992 = vdwg.mxu0
    %v993 = vmul.f32 %v990, 0.0025510204
    %v994 = vmul.f32 %v993, %v993
    %v996 = vrot.slane %v994, 7
    %v998 = vsub.f32 %v993, %v996
    %v999 = vmax.f32 %v998, 0.0
    %v1000 = vld [vmem:[%s12] sm:$0x1]
    %v1001 = vadd.f32 %v999, 1e-05
    %v1002 = vrsqrt.pop %v1001
    %v1005 = vunpack.c.l.s4 1966171168
    %v1006 = vunpack.c.0.s8 %v1005
    %v1007 = vlaneseq
    %v1008 = vshrl.u32 %v1007, 7
    %v1009 = vsub.s32 %v1006, %v1008
    %v1010 = vrot.slane %v1002, %v1009
    %v1011 = vcombine.high %v1010, %v1010
    %v1013 = vunpack.c.l.s4 1966171168
    %v1014 = vunpack.c.0.s8 %v1013
    %v1015 = vlaneseq
    %v1016 = vshrl.u32 %v1015, 7
    %v1017 = vsub.s32 %v1014, %v1016
    %v1018 = vrot.slane %v1011, %v1017
    %v1020 = vmul.f32 %v1000, %v1018
    %v1021 = vld [vmem:[%s13] sm:$0x1]
    %v1022 = vmul.f32 %v993, %v1020
    %v1023 = vsub.f32 %v1021, %v1022
    %v1025 = vlaneseq
    %v1026 = vshrl.u32 %v1025, 7
    %v1027 = vsub.s32 0, %v1026
    %v1028 = vrot.slane %v1023, %v1027
    %v1030 = vsel %vm272, %v1020, %v1028
    %v1031 = vld [vmem:[%s7] sm:$0xff]
    %vm1032 = vcmask 64512
    %v1034 = vsel %vm1032, %v1030, 0
    %1036 = vmatprep.subr.mxu0 0.0
    %1037 = vmatpush1.msra.mxu0 %v1031
    %1038 = vmatprep.subr.mxu0 0.0
    %1039 = vmatpush1.msra.mxu0 0.0
    %1040 = vmatprep.subr.mxu0 0.0
    %1041 = vmatpush1.msra.mxu0 0.0
    %1042 = vmatprep.subr.mxu0 0.0
    %1043 = vmatpush1.msra.mxu0 0.0
    %1044 = vmatprep.subr.mxu0 0.0
    %1045 = vmatpush1.msra.mxu0 0.0
    %1046 = vmatprep.subr.mxu0 0.0
    %1047 = vmatpush1.msra.mxu0 0.0
    %1048 = vmatprep.subr.mxu0 0.0
    %1049 = vmatpush1.msra.mxu0 0.0
    %1050 = vmatprep.subr.mxu0 0.0
    %1051 = vmatpush1.msra.mxu0 0.0
    %1052 = vmatprep.subr.mxu0 0.0
    %1053 = vmatpush1.msra.mxu0 0.0
    %1054 = vmatprep.subr.mxu0 0.0
    %1055 = vmatpush1.msra.mxu0 0.0
    %1056 = vmatprep.subr.mxu0 0.0
    %1057 = vmatpush1.msra.mxu0 0.0
    %1058 = vmatprep.subr.mxu0 0.0
    %1059 = vmatpush1.msra.mxu0 0.0
    %1060 = vmatprep.subr.mxu0 0.0
    %1061 = vmatpush1.msra.mxu0 0.0
    %1062 = vmatprep.subr.mxu0 0.0
    %1063 = vmatpush1.msra.mxu0 0.0
    %1064 = vmatprep.subr.mxu0 0.0
    %1065 = vmatpush1.msra.mxu0 0.0
    %1066 = vmatprep.subr.mxu0 0.0
    %1067 = vmatpush1.msra.mxu0 0.0
    %1068 = vmatprep.subr.mxu0 0.0
    %1069 = vmatpush1.msra.mxu0 0.0
    %1070 = vmatprep.subr.mxu0 0.0
    %1071 = vmatpush1.msra.mxu0 0.0
    %1072 = vmatprep.subr.mxu0 0.0
    %1073 = vmatpush1.msra.mxu0 0.0
    %1074 = vmatprep.subr.mxu0 0.0
    %1075 = vmatpush1.msra.mxu0 0.0
    %1076 = vmatprep.subr.mxu0 0.0
    %1077 = vmatpush1.msra.mxu0 0.0
    %1078 = vmatprep.subr.mxu0 0.0
    %1079 = vmatpush1.msra.mxu0 0.0
    %1080 = vmatprep.subr.mxu0 0.0
    %1081 = vmatpush1.msra.mxu0 0.0
    %1082 = vmatprep.subr.mxu0 0.0
    %1083 = vmatpush1.msra.mxu0 0.0
    %1084 = vmatprep.subr.mxu0 0.0
    %1085 = vmatpush1.msra.mxu0 0.0
    %1086 = vmatprep.subr.mxu0 0.0
    %1087 = vmatpush1.msra.mxu0 0.0
    %1088 = vmatprep.subr.mxu0 0.0
    %1089 = vmatpush1.msra.mxu0 0.0
    %1090 = vmatprep.subr.mxu0 0.0
    %1091 = vmatpush1.msra.mxu0 0.0
    %1092 = vmatprep.subr.mxu0 0.0
    %1093 = vmatpush1.msra.mxu0 0.0
    %1094 = vmatprep.subr.mxu0 0.0
    %1095 = vmatpush1.msra.mxu0 0.0
    %1096 = vmatprep.subr.mxu0 0.0
    %1097 = vmatpush1.msra.mxu0 0.0
    %1098 = vmatprep.subr.mxu0 0.0
    %1099 = vmatpush1.msra.mxu0 0.0
    %1100 = vmatprep.mubr.f32.mxu0 0.0
    %1101 = vmatmul.mubr.f32.gmra.mrb[0].mxu0 %v1034
    %v1102 = vpop.f32.mrb[0].mxu0
    %v1103 = vadd.f32 0.0, %v1102
    %v1104 = vpop.f32.mrb[0].mxu0
    %1105 = vdwg.mxu0
    %v1106 = vlaneseq
    %v1107 = vshrl.u32 %v1106, 7
    %v1108 = vsub.s32 0, %v1107
    %v1109 = vrot.slane %v1103, %v1108
    %v1110 = vmul.f32 %v860, %v1109
    %v1111 = vmul.f32 %v863, %v1109
    %v1112 = vmul.f32 %v868, %v1109
    %v1113 = vmul.f32 %v871, %v1109
    %v1114 = vlaneseq
    %v1115 = vshrl.u32 %v1114, 7
    %v1116 = vsub.s32 1, %v1115
    %v1117 = vrot.slane %v1103, %v1116
    %v1118 = vadd.f32 %v1110, %v1117
    %v1119 = vadd.f32 %v1111, %v1117
    %v1120 = vadd.f32 %v1112, %v1117
    %v1121 = vadd.f32 %v1113, %v1117
    %v1122 = vmax.f32 %v1118, 0.0
    %v1123 = vmax.f32 %v1119, 0.0
    %v1124 = vmax.f32 %v1120, 0.0
    %v1125 = vmax.f32 %v1121, 0.0
    %1126 = vst.msk [vmem:[#allocation4] sm:$0xff] %vm226, %v1122
    %1127 = vst.msk [vmem:[#allocation4 + $0x8] sm:$0xff] %vm226, %v1123
    %1128 = vst.msk [vmem:[#allocation4 + $0x10] sm:$0xff] %vm226, %v1124
    %1129 = vst.msk [vmem:[#allocation4 + $0x18] sm:$0xf] %vm879, %v1125
    %v1130 = vld [vmem:[#allocation4] ss:$2 sm:$0xff]
    %s1131 = scalar_lea.vmem [#allocation4], 16
    %v1132 = vld [vmem:[%s1131] ss:$2 sm:$0x3f]
    %s1133 = scalar_lea.vmem [#allocation4], 1
    %v1134 = vld [vmem:[%s1133] ss:$2 sm:$0xff]
    %s1135 = scalar_lea.vmem [#allocation4], 17
    %v1136 = vld [vmem:[%s1135] ss:$2 sm:$0x3f]
    %v1137 = vadd.f32 %v1130, %v1134
    %v1138 = vadd.f32 %v1132, %v1136
    %v1139 = vmul.f32 %v1137, 0.5
    %v1140 = vmul.f32 %v1138, 0.5
    %v1141 = vpack.c.bf16 %v1140, %v1139
    %v1142 = vld [vmem:[%s17] sm:$0xf]
    %v1143 = vld [vmem:[%s17 + $0x4] sm:$0xf]
    %v1144 = vld [vmem:[%s17 + $0x8] sm:$0xf]
    %v1145 = vld [vmem:[%s17 + $0xc] sm:$0xf]
    %v1146 = vld [vmem:[%s17 + $0x10] sm:$0xf]
    %v1147 = vld [vmem:[%s17 + $0x14] sm:$0xf]
    %v1148 = vld [vmem:[%s17 + $0x18] sm:$0xf]
    %v1149 = vld [vmem:[%s17 + $0x1c] sm:$0xf]
    %v1150 = vld [vmem:[%s17 + $0x20] sm:$0xf]
    %v1151 = vld [vmem:[%s17 + $0x24] sm:$0xf]
    %v1152 = vld [vmem:[%s17 + $0x28] sm:$0xf]
    %v1153 = vld [vmem:[%s17 + $0x2c] sm:$0xf]
    %v1154 = vld [vmem:[%s17 + $0x30] sm:$0xf]
    %v1155 = vld [vmem:[%s17 + $0x34] sm:$0xf]
    %v1170 = vunpack.c.l.b16 %v1142
    %v1171 = vunpack.c.l.b16 %v1143
    %v1172 = vunpack.c.l.b16 %v1144
    %v1173 = vunpack.c.l.b16 %v1145
    %v1174 = vunpack.c.l.b16 %v1146
    %v1175 = vunpack.c.l.b16 %v1147
    %v1176 = vunpack.c.l.b16 %v1148
    %v1177 = vunpack.c.l.b16 %v1149
    %v1178 = vunpack.c.l.b16 %v1150
    %v1179 = vunpack.c.l.b16 %v1151
    %v1180 = vunpack.c.l.b16 %v1152
    %v1181 = vunpack.c.l.b16 %v1153
    %v1182 = vunpack.c.l.b16 %v1154
    %v1183 = vunpack.c.l.b16 %v1155
    %v1184 = vpack.c.b16 %v1171, %v1170
    %v1185 = vpack.c.b16 %v1173, %v1172
    %v1186 = vpack.c.b16 %v1175, %v1174
    %v1187 = vpack.c.b16 %v1177, %v1176
    %v1188 = vpack.c.b16 %v1179, %v1178
    %v1189 = vpack.c.b16 %v1181, %v1180
    %v1190 = vpack.c.b16 %v1183, %v1182
    %v1199 = vsel %vm226, %v1141, 0
    %1201 = vmatprep.subr.bf16.mxu0 0
    %1202 = vmatpush1.bf16.msra.mxu0 %v1184
    %1203 = vmatprep.subr.bf16.mxu0 0
    %1204 = vmatpush1.bf16.msra.mxu0 %v1185
    %1205 = vmatprep.subr.bf16.mxu0 0
    %1206 = vmatpush1.bf16.msra.mxu0 %v1186
    %1207 = vmatprep.subr.bf16.mxu0 0
    %1208 = vmatpush1.bf16.msra.mxu0 %v1187
    %1209 = vmatprep.subr.bf16.mxu0 0
    %1210 = vmatpush1.bf16.msra.mxu0 %v1188
    %1211 = vmatprep.subr.bf16.mxu0 0
    %1212 = vmatpush1.bf16.msra.mxu0 %v1189
    %1213 = vmatprep.subr.bf16.mxu0 0
    %1214 = vmatpush1.bf16.msra.mxu0 %v1190
    %1215 = vmatprep.subr.bf16.mxu0 0
    %1216 = vmatpush1.bf16.msra.mxu0 0
    %1217 = vmatprep.subr.bf16.mxu0 0
    %1218 = vmatpush1.bf16.msra.mxu0 0
    %1219 = vmatprep.subr.bf16.mxu0 0
    %1220 = vmatpush1.bf16.msra.mxu0 0
    %1221 = vmatprep.subr.bf16.mxu0 0
    %1222 = vmatpush1.bf16.msra.mxu0 0
    %1223 = vmatprep.subr.bf16.mxu0 0
    %1224 = vmatpush1.bf16.msra.mxu0 0
    %1225 = vmatprep.subr.bf16.mxu0 0
    %1226 = vmatpush1.bf16.msra.mxu0 0
    %1227 = vmatprep.subr.bf16.mxu0 0
    %1228 = vmatpush1.bf16.msra.mxu0 0
    %1229 = vmatprep.subr.bf16.mxu0 0
    %1230 = vmatpush1.bf16.msra.mxu0 0
    %1231 = vmatprep.subr.bf16.mxu0 0
    %1232 = vmatpush1.bf16.msra.mxu0 0
    %1233 = vmatprep.mubr.bf16.mxu0 0
    %1234 = vmatmul.mubr.bf16.gmra.mrb[0].mxu0 %v1199
    %v1235 = vpop.f32.mrb[0].mxu0
    %v1236 = vadd.f32 0.0, %v1235
    %v1237 = vpop.f32.mrb[0].mxu0
    %v1238 = vpop.f32.mrb[0].mxu0
    %v1239 = vadd.f32 0.0, %v1238
    %v1240 = vpop.f32.mrb[0].mxu0
    %1241 = vdwg.mxu0
    %vm1242 = vcmask 457728
    %1243 = vst.msk [vmem:[#allocation5] sm:$0xff] %vm1242, %v1236
    %vm1244 = vcmask 455680
    %1245 = vst.msk [vmem:[#allocation5 + $0x8] sm:$0x3f] %vm1244, %v1239
    %v1246 = vld [vmem:[#allocation5] ss:$2 sm:$0x7]
    %s1247 = scalar_lea.vmem [#allocation5], 7
    %v1248 = vld [vmem:[%s1247] ss:$2 sm:$0x7]
    %v1250 = vrot.slane %v1248, 5
    %vm1252 = vcmask 1042432
    %v1253 = vsel %vm1252, %v1246, %v1250
    %s1254 = scalar_lea.vmem [#allocation5], 1
    %v1255 = vld [vmem:[%s1254] ss:$2 sm:$0x7]
    %s1256 = scalar_lea.vmem [#allocation5], 8
    %v1257 = vld [vmem:[%s1256] ss:$2 sm:$0x7]
    %v1259 = vrot.slane %v1257, 5
    %v1261 = vsel %vm1252, %v1255, %v1259
    %s1262 = scalar_lea.vmem [#allocation5], 2
    %v1263 = vld [vmem:[%s1262] ss:$2 sm:$0x7]
    %s1264 = scalar_lea.vmem [#allocation5], 9
    %v1265 = vld [vmem:[%s1264] ss:$2 sm:$0x7]
    %v1267 = vrot.slane %v1265, 5
    %v1269 = vsel %vm1252, %v1263, %v1267
    %1271 = vrot.lane.b32.xlu0 %v1261, 56
    %v1272 = vpop.permute.xlu0 %1271
    %1275 = vrot.lane.b32.xlu0 %v1269, 112
    %v1276 = vpop.permute.xlu0 %1275
    %v1278 = vsel %vm1242, %v1253, %v1272
    %v1279 = vsel %vm226, %v1278, %v1276
    %v1280 = vpack.c.bf16 %v1279, %v1279
    %v1281 = vpack.c.bf16 %v1276, %v1276
    %v1282 = vld [vmem:[%s3] sm:$0xf]
    %v1283 = vld [vmem:[%s3 + $0x4] sm:$0xf]
    %v1284 = vld [vmem:[%s3 + $0x8] sm:$0xf]
    %v1285 = vld [vmem:[%s3 + $0xc] sm:$0xf]
    %v1286 = vld [vmem:[%s3 + $0x10] sm:$0xf]
    %v1287 = vld [vmem:[%s3 + $0x14] sm:$0xf]
    %v1288 = vld [vmem:[%s3 + $0x18] sm:$0xf]
    %v1289 = vld [vmem:[%s3 + $0x1c] sm:$0xf]
    %v1290 = vld [vmem:[%s3 + $0x20] sm:$0xf]
    %v1291 = vld [vmem:[%s3 + $0x24] sm:$0xf]
    %v1292 = vld [vmem:[%s3 + $0x28] sm:$0xf]
    %v1293 = vld [vmem:[%s3 + $0x2c] sm:$0xf]
    %v1294 = vld [vmem:[%s3 + $0x30] sm:$0xf]
    %v1295 = vld [vmem:[%s3 + $0x34] sm:$0xf]
    %v1296 = vld [vmem:[%s3 + $0x38] sm:$0xf]
    %v1297 = vld [vmem:[%s3 + $0x3c] sm:$0xf]
    %v1298 = vld [vmem:[%s3 + $0x40] sm:$0xf]
    %v1299 = vld [vmem:[%s3 + $0x44] sm:$0xf]
    %v1300 = vld [vmem:[%s3 + $0x48] sm:$0xf]
    %v1301 = vld [vmem:[%s3 + $0x4c] sm:$0xf]
    %v1302 = vld [vmem:[%s3 + $0x50] sm:$0xf]
    %v1324 = vunpack.c.l.b16 %v1282
    %v1325 = vunpack.c.l.b16 %v1283
    %v1326 = vunpack.c.l.b16 %v1284
    %v1327 = vunpack.c.l.b16 %v1285
    %v1328 = vunpack.c.l.b16 %v1286
    %v1329 = vunpack.c.l.b16 %v1287
    %v1330 = vunpack.c.l.b16 %v1288
    %v1331 = vunpack.c.l.b16 %v1289
    %v1332 = vunpack.c.l.b16 %v1290
    %v1333 = vunpack.c.l.b16 %v1291
    %v1334 = vunpack.c.l.b16 %v1292
    %v1335 = vunpack.c.l.b16 %v1293
    %v1336 = vunpack.c.l.b16 %v1294
    %v1337 = vunpack.c.l.b16 %v1295
    %v1338 = vunpack.c.l.b16 %v1296
    %v1339 = vunpack.c.l.b16 %v1297
    %v1340 = vunpack.c.l.b16 %v1298
    %v1341 = vunpack.c.l.b16 %v1299
    %v1342 = vunpack.c.l.b16 %v1300
    %v1343 = vunpack.c.l.b16 %v1301
    %v1344 = vunpack.c.l.b16 %v1302
    %v1345 = vpack.c.b16 %v1325, %v1324
    %v1346 = vpack.c.b16 %v1327, %v1326
    %v1347 = vpack.c.b16 %v1329, %v1328
    %v1348 = vpack.c.b16 %v1331, %v1330
    %v1349 = vpack.c.b16 %v1333, %v1332
    %v1350 = vpack.c.b16 %v1335, %v1334
    %v1351 = vpack.c.b16 %v1337, %v1336
    %v1352 = vpack.c.b16 %v1339, %v1338
    %v1353 = vpack.c.b16 %v1341, %v1340
    %v1354 = vpack.c.b16 %v1343, %v1342
    %v1355 = vpack.c.b16 %v1344, %v1344
    %vm1366 = vcmask 326656
    %v1368 = vsel %vm1366, %v1281, 0
    %v1371 = vsel %vm404, %v1355, 0
    %1373 = vmatprep.subr.bf16.mxu0 0
    %1374 = vmatpush1.bf16.msra.mxu0 %v1345
    %1375 = vmatprep.subr.bf16.mxu0 0
    %1376 = vmatpush1.bf16.msra.mxu0 %v1346
    %1377 = vmatprep.subr.bf16.mxu0 0
    %1378 = vmatpush1.bf16.msra.mxu0 %v1347
    %1379 = vmatprep.subr.bf16.mxu0 0
    %1380 = vmatpush1.bf16.msra.mxu0 %v1348
    %1381 = vmatprep.subr.bf16.mxu0 0
    %1382 = vmatpush1.bf16.msra.mxu0 %v1349
    %1383 = vmatprep.subr.bf16.mxu0 0
    %1384 = vmatpush1.bf16.msra.mxu0 %v1350
    %1385 = vmatprep.subr.bf16.mxu0 0
    %1386 = vmatpush1.bf16.msra.mxu0 %v1351
    %1387 = vmatprep.subr.bf16.mxu0 0
    %1388 = vmatpush1.bf16.msra.mxu0 %v1352
    %1389 = vmatprep.subr.bf16.mxu0 0
    %1390 = vmatpush1.bf16.msra.mxu0 %v1353
    %1391 = vmatprep.subr.bf16.mxu0 0
    %1392 = vmatpush1.bf16.msra.mxu0 %v1354
    %1393 = vmatprep.subr.bf16.mxu0 0
    %1394 = vmatpush1.bf16.msra.mxu0 %v1371
    %1395 = vmatprep.subr.bf16.mxu0 0
    %1396 = vmatpush1.bf16.msra.mxu0 0
    %1397 = vmatprep.subr.bf16.mxu0 0
    %1398 = vmatpush1.bf16.msra.mxu0 0
    %1399 = vmatprep.subr.bf16.mxu0 0
    %1400 = vmatpush1.bf16.msra.mxu0 0
    %1401 = vmatprep.subr.bf16.mxu0 0
    %1402 = vmatpush1.bf16.msra.mxu0 0
    %1403 = vmatprep.subr.bf16.mxu0 0
    %1404 = vmatpush1.bf16.msra.mxu0 0
    %1405 = vmatprep.mubr.bf16.mxu0 %v1368
    %1406 = vmatmul.mubr.bf16.gmra.mrb[0].mxu0 %v1280
    %v1407 = vpop.f32.mrb[0].mxu0
    %v1408 = vadd.f32 0.0, %v1407
    %v1409 = vpop.f32.mrb[0].mxu0
    %v1410 = vpop.f32.mrb[0].mxu0
    %v1411 = vpop.f32.mrb[0].mxu0
    %1412 = vdwg.mxu0
    %vm1413 = vcmask 390144
    %v1414 = vsel %vm1413, %v1408, 0.0
    %v1415 = vrot.slane %v1414, 4
    %v1416 = vadd.f32 %v1414, %v1415
    %v1417 = vrot.slane %v1416, 2
    %v1418 = vadd.f32 %v1416, %v1417
    %v1419 = vrot.slane %v1418, 1
    %v1420 = vadd.f32 %v1418, %v1419
    %v1421 = vmul.f32 %v1408, %v1408
    %v1422 = vsel %vm1413, %v1421, 0.0
    %v1423 = vrot.slane %v1422, 4
    %v1424 = vadd.f32 %v1422, %v1423
    %v1425 = vrot.slane %v1424, 2
    %v1426 = vadd.f32 %v1424, %v1425
    %v1427 = vrot.slane %v1426, 1
    %v1428 = vadd.f32 %v1426, %v1427
    %v1429 = vsel %vm272, %v1420, %v1428
    %v1430 = vld [vmem:[%s8] sm:$0xff]
    %v1431 = vld [vmem:[%s8 + $0x8] sm:$0xff]
    %v1432 = vld [vmem:[%s8 + $0x10] sm:$0xff]
    %v1433 = vld [vmem:[%s8 + $0x18] sm:$0xff]
    %v1434 = vld [vmem:[%s8 + $0x20] sm:$0xff]
    %v1435 = vld [vmem:[%s8 + $0x28] sm:$0xff]
    %vm1436 = vcmask 392192
    %v1438 = vsel %vm1436, %v1429, 0
    %1440 = vmatprep.subr.mxu0 0.0
    %1441 = vmatpush1.msra.mxu0 %v1430
    %1442 = vmatprep.subr.mxu0 0.0
    %1443 = vmatpush1.msra.mxu0 %v1431
    %1444 = vmatprep.subr.mxu0 0.0
    %1445 = vmatpush1.msra.mxu0 %v1432
    %1446 = vmatprep.subr.mxu0 0.0
    %1447 = vmatpush1.msra.mxu0 %v1433
    %1448 = vmatprep.subr.mxu0 0.0
    %1449 = vmatpush1.msra.mxu0 %v1434
    %1450 = vmatprep.subr.mxu0 0.0
    %1451 = vmatpush1.msra.mxu0 %v1435
    %1452 = vmatprep.subr.mxu0 0.0
    %1453 = vmatpush1.msra.mxu0 0.0
    %1454 = vmatprep.subr.mxu0 0.0
    %1455 = vmatpush1.msra.mxu0 0.0
    %1456 = vmatprep.subr.mxu0 0.0
    %1457 = vmatpush1.msra.mxu0 0.0
    %1458 = vmatprep.subr.mxu0 0.0
    %1459 = vmatpush1.msra.mxu0 0.0
    %1460 = vmatprep.subr.mxu0 0.0
    %1461 = vmatpush1.msra.mxu0 0.0
    %1462 = vmatprep.subr.mxu0 0.0
    %1463 = vmatpush1.msra.mxu0 0.0
    %1464 = vmatprep.subr.mxu0 0.0
    %1465 = vmatpush1.msra.mxu0 0.0
    %1466 = vmatprep.subr.mxu0 0.0
    %1467 = vmatpush1.msra.mxu0 0.0
    %1468 = vmatprep.subr.mxu0 0.0
    %1469 = vmatpush1.msra.mxu0 0.0
    %1470 = vmatprep.subr.mxu0 0.0
    %1471 = vmatpush1.msra.mxu0 0.0
    %1472 = vmatprep.subr.mxu0 0.0
    %1473 = vmatpush1.msra.mxu0 0.0
    %1474 = vmatprep.subr.mxu0 0.0
    %1475 = vmatpush1.msra.mxu0 0.0
    %1476 = vmatprep.subr.mxu0 0.0
    %1477 = vmatpush1.msra.mxu0 0.0
    %1478 = vmatprep.subr.mxu0 0.0
    %1479 = vmatpush1.msra.mxu0 0.0
    %1480 = vmatprep.subr.mxu0 0.0
    %1481 = vmatpush1.msra.mxu0 0.0
    %1482 = vmatprep.subr.mxu0 0.0
    %1483 = vmatpush1.msra.mxu0 0.0
    %1484 = vmatprep.subr.mxu0 0.0
    %1485 = vmatpush1.msra.mxu0 0.0
    %1486 = vmatprep.subr.mxu0 0.0
    %1487 = vmatpush1.msra.mxu0 0.0
    %1488 = vmatprep.subr.mxu0 0.0
    %1489 = vmatpush1.msra.mxu0 0.0
    %1490 = vmatprep.subr.mxu0 0.0
    %1491 = vmatpush1.msra.mxu0 0.0
    %1492 = vmatprep.subr.mxu0 0.0
    %1493 = vmatpush1.msra.mxu0 0.0
    %1494 = vmatprep.subr.mxu0 0.0
    %1495 = vmatpush1.msra.mxu0 0.0
    %1496 = vmatprep.subr.mxu0 0.0
    %1497 = vmatpush1.msra.mxu0 0.0
    %1498 = vmatprep.subr.mxu0 0.0
    %1499 = vmatpush1.msra.mxu0 0.0
    %1500 = vmatprep.subr.mxu0 0.0
    %1501 = vmatpush1.msra.mxu0 0.0
    %1502 = vmatprep.subr.mxu0 0.0
    %1503 = vmatpush1.msra.mxu0 0.0
    %1504 = vmatprep.mubr.f32.mxu0 0.0
    %1505 = vmatmul.mubr.f32.gmra.mrb[0].mxu0 %v1438
    %v1506 = vpop.f32.mrb[0].mxu0
    %v1507 = vadd.f32 0.0, %v1506
    %v1508 = vpop.f32.mrb[0].mxu0
    %1509 = vdwg.mxu0
    %v1510 = vmul.f32 %v1507, 0.055555556
    %v1511 = vmul.f32 %v1510, %v1510
    %v1513 = vrot.slane %v1511, 7
    %v1515 = vsub.f32 %v1510, %v1513
    %v1516 = vmax.f32 %v1515, 0.0
    %v1517 = vld [vmem:[%s14] sm:$0x1]
    %v1518 = vadd.f32 %v1516, 1e-05
    %v1519 = vrsqrt.pop %v1518
    %v1522 = vunpack.c.l.s4 1966171168
    %v1523 = vunpack.c.0.s8 %v1522
    %v1524 = vlaneseq
    %v1525 = vshrl.u32 %v1524, 7
    %v1526 = vsub.s32 %v1523, %v1525
    %v1527 = vrot.slane %v1519, %v1526
    %v1528 = vcombine.high %v1527, %v1527
    %v1530 = vunpack.c.l.s4 1966171168
    %v1531 = vunpack.c.0.s8 %v1530
    %v1532 = vlaneseq
    %v1533 = vshrl.u32 %v1532, 7
    %v1534 = vsub.s32 %v1531, %v1533
    %v1535 = vrot.slane %v1528, %v1534
    %v1537 = vmul.f32 %v1517, %v1535
    %v1538 = vld [vmem:[%s15] sm:$0x1]
    %v1539 = vmul.f32 %v1510, %v1537
    %v1540 = vsub.f32 %v1538, %v1539
    %v1542 = vlaneseq
    %v1543 = vshrl.u32 %v1542, 7
    %v1544 = vsub.s32 0, %v1543
    %v1545 = vrot.slane %v1540, %v1544
    %v1547 = vsel %vm272, %v1537, %v1545
    %v1548 = vld [vmem:[%s9] sm:$0xff]
    %v1549 = vld [vmem:[%s9 + $0x8] sm:$0xff]
    %vm1550 = vcmask 130048
    %v1552 = vsel %vm1550, %v1547, 0
    %1554 = vmatprep.subr.mxu0 0.0
    %1555 = vmatpush1.msra.mxu0 %v1548
    %1556 = vmatprep.subr.mxu0 0.0
    %1557 = vmatpush1.msra.mxu0 %v1549
    %1558 = vmatprep.subr.mxu0 0.0
    %1559 = vmatpush1.msra.mxu0 0.0
    %1560 = vmatprep.subr.mxu0 0.0
    %1561 = vmatpush1.msra.mxu0 0.0
    %1562 = vmatprep.subr.mxu0 0.0
    %1563 = vmatpush1.msra.mxu0 0.0
    %1564 = vmatprep.subr.mxu0 0.0
    %1565 = vmatpush1.msra.mxu0 0.0
    %1566 = vmatprep.subr.mxu0 0.0
    %1567 = vmatpush1.msra.mxu0 0.0
    %1568 = vmatprep.subr.mxu0 0.0
    %1569 = vmatpush1.msra.mxu0 0.0
    %1570 = vmatprep.subr.mxu0 0.0
    %1571 = vmatpush1.msra.mxu0 0.0
    %1572 = vmatprep.subr.mxu0 0.0
    %1573 = vmatpush1.msra.mxu0 0.0
    %1574 = vmatprep.subr.mxu0 0.0
    %1575 = vmatpush1.msra.mxu0 0.0
    %1576 = vmatprep.subr.mxu0 0.0
    %1577 = vmatpush1.msra.mxu0 0.0
    %1578 = vmatprep.subr.mxu0 0.0
    %1579 = vmatpush1.msra.mxu0 0.0
    %1580 = vmatprep.subr.mxu0 0.0
    %1581 = vmatpush1.msra.mxu0 0.0
    %1582 = vmatprep.subr.mxu0 0.0
    %1583 = vmatpush1.msra.mxu0 0.0
    %1584 = vmatprep.subr.mxu0 0.0
    %1585 = vmatpush1.msra.mxu0 0.0
    %1586 = vmatprep.subr.mxu0 0.0
    %1587 = vmatpush1.msra.mxu0 0.0
    %1588 = vmatprep.subr.mxu0 0.0
    %1589 = vmatpush1.msra.mxu0 0.0
    %1590 = vmatprep.subr.mxu0 0.0
    %1591 = vmatpush1.msra.mxu0 0.0
    %1592 = vmatprep.subr.mxu0 0.0
    %1593 = vmatpush1.msra.mxu0 0.0
    %1594 = vmatprep.subr.mxu0 0.0
    %1595 = vmatpush1.msra.mxu0 0.0
    %1596 = vmatprep.subr.mxu0 0.0
    %1597 = vmatpush1.msra.mxu0 0.0
    %1598 = vmatprep.subr.mxu0 0.0
    %1599 = vmatpush1.msra.mxu0 0.0
    %1600 = vmatprep.subr.mxu0 0.0
    %1601 = vmatpush1.msra.mxu0 0.0
    %1602 = vmatprep.subr.mxu0 0.0
    %1603 = vmatpush1.msra.mxu0 0.0
    %1604 = vmatprep.subr.mxu0 0.0
    %1605 = vmatpush1.msra.mxu0 0.0
    %1606 = vmatprep.subr.mxu0 0.0
    %1607 = vmatpush1.msra.mxu0 0.0
    %1608 = vmatprep.subr.mxu0 0.0
    %1609 = vmatpush1.msra.mxu0 0.0
    %1610 = vmatprep.subr.mxu0 0.0
    %1611 = vmatpush1.msra.mxu0 0.0
    %1612 = vmatprep.subr.mxu0 0.0
    %1613 = vmatpush1.msra.mxu0 0.0
    %1614 = vmatprep.subr.mxu0 0.0
    %1615 = vmatpush1.msra.mxu0 0.0
    %1616 = vmatprep.subr.mxu0 0.0
    %1617 = vmatpush1.msra.mxu0 0.0
    %1618 = vmatprep.mubr.f32.mxu0 0.0
    %1619 = vmatmul.mubr.f32.gmra.mrb[0].mxu0 %v1552
    %v1620 = vpop.f32.mrb[0].mxu0
    %v1621 = vadd.f32 0.0, %v1620
    %v1622 = vpop.f32.mrb[0].mxu0
    %1623 = vdwg.mxu0
    %v1624 = vlaneseq
    %v1625 = vshrl.u32 %v1624, 7
    %v1626 = vsub.s32 0, %v1625
    %v1627 = vrot.slane %v1621, %v1626
    %v1628 = vmul.f32 %v1408, %v1627
    %v1629 = vlaneseq
    %v1630 = vshrl.u32 %v1629, 7
    %v1631 = vsub.s32 1, %v1630
    %v1632 = vrot.slane %v1621, %v1631
    %v1633 = vadd.f32 %v1628, %v1632
    %v1634 = vmax.f32 %v1633, 0.0
    %1635 = vst.msk [vmem:[#allocation6] sm:$0x3f] %vm1413, %v1634
    %v1636 = vld [vmem:[#allocation6] ss:$3 sm:$0x3]
    %s1637 = scalar_lea.vmem [#allocation6], 1
    %v1638 = vld [vmem:[%s1637] ss:$3 sm:$0x3]
    %s1639 = scalar_lea.vmem [#allocation6], 2
    %v1640 = vld [vmem:[%s1639] ss:$3 sm:$0x3]
    %1642 = vrot.lane.b32.xlu0 %v1638, 48
    %v1643 = vpop.permute.xlu0 %1642
    %1646 = vrot.lane.b32.xlu0 %v1640, 96
    %v1647 = vpop.permute.xlu0 %1646
    %v1649 = vsel %vm1436, %v1636, %v1643
    %vm1650 = vcmask 785408
    %v1651 = vsel %vm1650, %v1649, %v1647
    %v1652 = vpack.c.bf16 %v1651, %v1651
    %v1653 = vpack.c.bf16 %v1647, %v1647
    %v1654 = vld [vmem:[%s18] sm:$0xf]
    %v1655 = vld [vmem:[%s18 + $0x4] sm:$0xf]
    %v1656 = vld [vmem:[%s18 + $0x8] sm:$0xf]
    %v1657 = vld [vmem:[%s18 + $0xc] sm:$0xf]
    %v1658 = vld [vmem:[%s18 + $0x10] sm:$0xf]
    %v1659 = vld [vmem:[%s18 + $0x14] sm:$0xf]
    %v1660 = vld [vmem:[%s18 + $0x18] sm:$0xf]
    %v1661 = vld [vmem:[%s18 + $0x1c] sm:$0xf]
    %v1662 = vld [vmem:[%s18 + $0x20] sm:$0xf]
    %v1663 = vld [vmem:[%s18 + $0x24] sm:$0xf]
    %v1664 = vld [vmem:[%s18 + $0x28] sm:$0xf]
    %v1665 = vld [vmem:[%s18 + $0x2c] sm:$0xf]
    %v1666 = vld [vmem:[%s18 + $0x30] sm:$0xf]
    %v1667 = vld [vmem:[%s18 + $0x34] sm:$0xf]
    %v1668 = vld [vmem:[%s18 + $0x38] sm:$0xf]
    %v1669 = vld [vmem:[%s18 + $0x3c] sm:$0xf]
    %v1670 = vld [vmem:[%s18 + $0x40] sm:$0xf]
    %v1671 = vld [vmem:[%s18 + $0x44] sm:$0xf]
    %v1672 = vld [vmem:[%s19] sm:$0x1]
    %v1674 = vlaneseq
    %v1675 = vshrl.u32 %v1674, 7
    %v1676 = vsub.s32 0, %v1675
    %v1677 = vrot.slane %v1672, %v1676
    %v1697 = vunpack.c.l.b16 %v1654
    %v1698 = vunpack.c.l.b16 %v1655
    %v1699 = vunpack.c.l.b16 %v1656
    %v1700 = vunpack.c.l.b16 %v1657
    %v1701 = vunpack.c.l.b16 %v1658
    %v1702 = vunpack.c.l.b16 %v1659
    %v1703 = vunpack.c.l.b16 %v1660
    %v1704 = vunpack.c.l.b16 %v1661
    %v1705 = vunpack.c.l.b16 %v1662
    %v1706 = vunpack.c.l.b16 %v1663
    %v1707 = vunpack.c.l.b16 %v1664
    %v1708 = vunpack.c.l.b16 %v1665
    %v1709 = vunpack.c.l.b16 %v1666
    %v1710 = vunpack.c.l.b16 %v1667
    %v1711 = vunpack.c.l.b16 %v1668
    %v1712 = vunpack.c.l.b16 %v1669
    %v1713 = vunpack.c.l.b16 %v1670
    %v1714 = vunpack.c.l.b16 %v1671
    %v1715 = vpack.c.b16 %v1698, %v1697
    %v1716 = vpack.c.b16 %v1700, %v1699
    %v1717 = vpack.c.b16 %v1702, %v1701
    %v1718 = vpack.c.b16 %v1704, %v1703
    %v1719 = vpack.c.b16 %v1706, %v1705
    %v1720 = vpack.c.b16 %v1708, %v1707
    %v1721 = vpack.c.b16 %v1710, %v1709
    %v1722 = vpack.c.b16 %v1712, %v1711
    %v1723 = vpack.c.b16 %v1714, %v1713
    %v1734 = vsel %vm1550, %v1653, 0
    %1736 = vmatprep.subr.bf16.mxu0 0
    %1737 = vmatpush1.bf16.msra.mxu0 %v1715
    %1738 = vmatprep.subr.bf16.mxu0 0
    %1739 = vmatpush1.bf16.msra.mxu0 %v1716
    %1740 = vmatprep.subr.bf16.mxu0 0
    %1741 = vmatpush1.bf16.msra.mxu0 %v1717
    %1742 = vmatprep.subr.bf16.mxu0 0
    %1743 = vmatpush1.bf16.msra.mxu0 %v1718
    %1744 = vmatprep.subr.bf16.mxu0 0
    %1745 = vmatpush1.bf16.msra.mxu0 %v1719
    %1746 = vmatprep.subr.bf16.mxu0 0
    %1747 = vmatpush1.bf16.msra.mxu0 %v1720
    %1748 = vmatprep.subr.bf16.mxu0 0
    %1749 = vmatpush1.bf16.msra.mxu0 %v1721
    %1750 = vmatprep.subr.bf16.mxu0 0
    %1751 = vmatpush1.bf16.msra.mxu0 %v1722
    %1752 = vmatprep.subr.bf16.mxu0 0
    %1753 = vmatpush1.bf16.msra.mxu0 %v1723
    %1754 = vmatprep.subr.bf16.mxu0 0
    %1755 = vmatpush1.bf16.msra.mxu0 0
    %1756 = vmatprep.subr.bf16.mxu0 0
    %1757 = vmatpush1.bf16.msra.mxu0 0
    %1758 = vmatprep.subr.bf16.mxu0 0
    %1759 = vmatpush1.bf16.msra.mxu0 0
    %1760 = vmatprep.subr.bf16.mxu0 0
    %1761 = vmatpush1.bf16.msra.mxu0 0
    %1762 = vmatprep.subr.bf16.mxu0 0
    %1763 = vmatpush1.bf16.msra.mxu0 0
    %1764 = vmatprep.subr.bf16.mxu0 0
    %1765 = vmatpush1.bf16.msra.mxu0 0
    %1766 = vmatprep.subr.bf16.mxu0 0
    %1767 = vmatpush1.bf16.msra.mxu0 0
    %1768 = vmatprep.mubr.bf16.mxu0 %v1734
    %1769 = vmatmul.mubr.bf16.gmra.mrb[0].mxu0 %v1652
    %v1770 = vpop.f32.mrb[0].mxu0
    %v1771 = vadd.f32 %v1677, %v1770
    %v1772 = vpop.f32.mrb[0].mxu0
    %v1773 = vpop.f32.mrb[0].mxu0
    %v1774 = vpop.f32.mrb[0].mxu0
    %1775 = vdwg.mxu0
    %v1776 = vmax.f32 %v1771, 0.0
    %v1777 = vpack.c.bf16 %v1776, %v1776
    %v1778 = vld [vmem:[%s20] sm:$0xf]
    %v1779 = vld [vmem:[%s20 + $0x4] sm:$0xf]
    %v1780 = vld [vmem:[%s20 + $0x8] sm:$0xf]
    %v1781 = vld [vmem:[%s20 + $0xc] sm:$0xf]
    %v1782 = vld [vmem:[%s20 + $0x10] sm:$0xf]
    %v1783 = vld [vmem:[%s20 + $0x14] sm:$0xf]
    %v1784 = vld [vmem:[%s20 + $0x18] sm:$0xf]
    %v1785 = vld [vmem:[%s20 + $0x1c] sm:$0xf]
    %v1786 = vld [vmem:[%s20 + $0x20] sm:$0xf]
    %v1787 = vld [vmem:[%s21] sm:$0x1]
    %v1789 = vlaneseq
    %v1790 = vshrl.u32 %v1789, 7
    %v1791 = vsub.s32 0, %v1790
    %v1792 = vrot.slane %v1787, %v1791
    %v1803 = vunpack.c.l.b16 %v1778
    %v1804 = vunpack.c.l.b16 %v1779
    %v1805 = vunpack.c.l.b16 %v1780
    %v1806 = vunpack.c.l.b16 %v1781
    %v1807 = vunpack.c.l.b16 %v1782
    %v1808 = vunpack.c.l.b16 %v1783
    %v1809 = vunpack.c.l.b16 %v1784
    %v1810 = vunpack.c.l.b16 %v1785
    %v1811 = vunpack.c.l.b16 %v1786
    %v1812 = vpack.c.b16 %v1804, %v1803
    %v1813 = vpack.c.b16 %v1806, %v1805
    %v1814 = vpack.c.b16 %v1808, %v1807
    %v1815 = vpack.c.b16 %v1810, %v1809
    %v1816 = vpack.c.b16 %v1811, %v1811
    %vm1821 = vcmask 588800
    %v1823 = vsel %vm1821, %v1777, 0
    %v1826 = vsel %vm404, %v1816, 0
    %1828 = vmatprep.subr.bf16.mxu0 0
    %1829 = vmatpush1.bf16.msra.mxu0 %v1812
    %1830 = vmatprep.subr.bf16.mxu0 0
    %1831 = vmatpush1.bf16.msra.mxu0 %v1813
    %1832 = vmatprep.subr.bf16.mxu0 0
    %1833 = vmatpush1.bf16.msra.mxu0 %v1814
    %1834 = vmatprep.subr.bf16.mxu0 0
    %1835 = vmatpush1.bf16.msra.mxu0 %v1815
    %1836 = vmatprep.subr.bf16.mxu0 0
    %1837 = vmatpush1.bf16.msra.mxu0 %v1826
    %1838 = vmatprep.subr.bf16.mxu0 0
    %1839 = vmatpush1.bf16.msra.mxu0 0
    %1840 = vmatprep.subr.bf16.mxu0 0
    %1841 = vmatpush1.bf16.msra.mxu0 0
    %1842 = vmatprep.subr.bf16.mxu0 0
    %1843 = vmatpush1.bf16.msra.mxu0 0
    %1844 = vmatprep.subr.bf16.mxu0 0
    %1845 = vmatpush1.bf16.msra.mxu0 0
    %1846 = vmatprep.subr.bf16.mxu0 0
    %1847 = vmatpush1.bf16.msra.mxu0 0
    %1848 = vmatprep.subr.bf16.mxu0 0
    %1849 = vmatpush1.bf16.msra.mxu0 0
    %1850 = vmatprep.subr.bf16.mxu0 0
    %1851 = vmatpush1.bf16.msra.mxu0 0
    %1852 = vmatprep.subr.bf16.mxu0 0
    %1853 = vmatpush1.bf16.msra.mxu0 0
    %1854 = vmatprep.subr.bf16.mxu0 0
    %1855 = vmatpush1.bf16.msra.mxu0 0
    %1856 = vmatprep.subr.bf16.mxu0 0
    %1857 = vmatpush1.bf16.msra.mxu0 0
    %1858 = vmatprep.subr.bf16.mxu0 0
    %1859 = vmatpush1.bf16.msra.mxu0 0
    %1860 = vmatprep.mubr.bf16.mxu0 0
    %1861 = vmatmul.mubr.bf16.gmra.mrb[0].mxu0 %v1823
    %v1862 = vpop.f32.mrb[0].mxu0
    %v1863 = vadd.f32 %v1792, %v1862
    %v1864 = vpop.f32.mrb[0].mxu0
    %v1865 = vpop.f32.mrb[0].mxu0
    %v1866 = vpop.f32.mrb[0].mxu0
    %1867 = vdwg.mxu0
    %vm1868 = vcmask 74752
    %1869 = vst.msk [vmem:[#allocation7] sm:$0x3] %vm1868, %v1863
    // Predicated region
    $region90: #{cnn_forward.1} parent=1 // pred_check
      _
    $region91: #{cnn_forward.1} parent=1 // pred_check_branch
      %1871 = sbr.rel (0) target = $region93
    $region92: #{cnn_forward.1} parent=1 // pred_region
      %s1873 = ssub.s32 32, 32
      %1874 = vsyncadd [#allocation8], %s1873
      %s1876 = sshll.u32 [#allocation7], 4
      %s1877 = int_to_ptr.vmem [resolvable:$true] %s1876
      %1879 = dma.vmem_to_hbm [thread:$0]  %s1877, 32, %s22, [#allocation8]
    $region93: #{cnn_forward.1} parent=1 // pred_fallthru
      _
    // Predicated region
    $region94: #{cnn_forward.1} parent=1 // pred_check
      _
    $region95: #{cnn_forward.1} parent=1 // pred_check_branch
      %1881 = sbr.rel (0) target = $region97
    $region96: #{cnn_forward.1} parent=1 // pred_region
      %1882 = dma.done [#allocation8], 32
    $region97: #{cnn_forward.1} parent=1 // pred_fallthru
      _
    %1883 = vsyncpa [#allocation8], 1

</llo_original>
